<compile_context>
chip_gen: v6e
topology: v6e:2x2x1
jax: 0.10.0
libtpu: 0.0.40
codegen_flags: <defaults>
</compile_context>

<pallas_src>
import functools
import time

import jax
import jax.numpy as jnp
import numpy as np
from jax.experimental import pallas as pl
from jax.experimental.pallas import tpu as pltpu


BIAS_ROWS = 16  # bias block padded to a full bf16 (16, 128) tile in the fused buffer


# ---------------- Pallas kernel: batched RNN-T joiner step ----------------

def rnnt_joiner_kernel(x_ref, h_ref, w_ref, tok_ref, tkv_ref, tki_ref, hout_ref,
                       *, best_n):
    TQ, DP = x_ref.shape
    H = h_ref.shape[1]
    V = tkv_ref.shape[1]

    # Fused weight buffer (bf16, VMEM-resident across the grid), static slices.
    wenc = w_ref[0:DP, :]                              # (DP, H)
    wpred = w_ref[DP:DP + H, :]                        # (H, H)
    wout = w_ref[DP + H:DP + 2 * H, :]                 # (H, V)
    bias = w_ref[DP + 2 * H:DP + 2 * H + BIAS_ROWS, :][0:1, :].astype(jnp.float32)

    # Joiner: two bf16 MXU matmuls with f32 accumulation, f32 nonlinearity.
    enc = jnp.dot(x_ref[...], wenc, preferred_element_type=jnp.float32)       # (TQ, H)
    pred = jnp.dot(h_ref[...].astype(jnp.bfloat16), wpred,
                   preferred_element_type=jnp.float32)                        # (1, H)
    joint = jnp.tanh(enc + pred + bias)                                       # (TQ, H) f32
    logits = jnp.dot(joint.astype(jnp.bfloat16), wout,
                     preferred_element_type=jnp.float32)                      # (TQ, V) f32

    # Greedy per-frame token: reuse the row max (argmax(logits) == argmax(logp)).
    m = jnp.max(logits, axis=-1, keepdims=True)                               # (TQ, 1)
    idx = jax.lax.broadcasted_iota(jnp.int32, (TQ, V), 1)
    tok_col = jnp.min(jnp.where(logits == m, idx, V), axis=-1, keepdims=True)  # (TQ, 1)
    # Lane-dense int32 output (unmasked stores); wrapper reads lane 0.
    tok_ref[...] = jnp.broadcast_to(tok_col, (TQ, V))

    # Last tile only: log-softmax of the final frame, in-kernel top-k, new state.
    @pl.when(pl.program_id(0) == pl.num_programs(0) - 1)
    def _():
        row = logits[TQ - 1:TQ, :]                                            # (1, V)
        mrow = m[TQ - 1:TQ, :]
        lse = mrow + jnp.log(jnp.sum(jnp.exp(row - mrow), axis=-1, keepdims=True))
        logp = row - lse                                                      # (1, V)
        lane = jax.lax.broadcasted_iota(jnp.int32, (1, V), 1)
        vals = jnp.full((1, V), -jnp.inf, jnp.float32)
        ids = jnp.full((1, V), -1, jnp.int32)
        work = logp
        for k in range(best_n):                                               # unrolled
            mk = jnp.max(work, axis=-1, keepdims=True)                        # (1, 1)
            ak = jnp.min(jnp.where(work == mk, lane, V), axis=-1, keepdims=True)
            vals = jnp.where(lane == k, mk, vals)
            ids = jnp.where(lane == k, ak, ids)
            work = jnp.where(lane == ak, -jnp.inf, work)
        tkv_ref[...] = vals
        tki_ref[...] = ids
        hout_ref[...] = joint[TQ - 1:TQ, :]   # streamed state = last joiner activation


def rnnt_joiner_step(x, h, w_fused, *, best_n):
    T, DP = x.shape
    H = h.shape[1]
    V = H
    TQ = 128 if T >= 128 else T
    assert T % TQ == 0, "frame chunk must be a multiple of the 128-frame tile"
    WR = w_fused.shape[0]

    grid_spec = pltpu.PrefetchScalarGridSpec(
        num_scalar_prefetch=0,
        grid=(T // TQ,),
        in_specs=[
            pl.BlockSpec((TQ, DP), lambda i: (i, 0)),   # frames stream through the grid
            pl.BlockSpec((1, H), lambda i: (0, 0)),     # recurrent state (resident)
            pl.BlockSpec((WR, H), lambda i: (0, 0)),    # fused bf16 weights: one DMA/call
        ],
        out_specs=[
            pl.BlockSpec((TQ, V), lambda i: (i, 0)),    # greedy tokens (lane-dense)
            pl.BlockSpec((1, V), lambda i: (0, 0)),     # top-k scores (last frame)
            pl.BlockSpec((1, V), lambda i: (0, 0)),     # top-k token ids (last frame)
            pl.BlockSpec((1, H), lambda i: (0, 0)),     # new streaming state
        ],
    )
    return pl.pallas_call(
        functools.partial(rnnt_joiner_kernel, best_n=best_n),
        out_shape=(
            jax.ShapeDtypeStruct((T, V), jnp.int32),
            jax.ShapeDtypeStruct((1, V), jnp.float32),
            jax.ShapeDtypeStruct((1, V), jnp.int32),
            jax.ShapeDtypeStruct((1, H), jnp.float32),
        ),
        grid_spec=grid_spec,
        input_output_aliases={1: 3},      # recurrent state updated in place
        compiler_params=pltpu.CompilerParams(
            dimension_semantics=("arbitrary",)),  # last-tile outputs are grid-resident
    )(x, h, w_fused)


# ---------------- jitted streaming step (pad + kernel + slicing) ----------

def _streaming_step(x, state, w_fused, *, d_in, best_n):
    T = x.shape[0]
    H = w_fused.shape[1]
    DP = w_fused.shape[0] - 2 * H - BIAS_ROWS
    # zero-pad features to the lane-aligned contraction width, cast to bf16
    xb = jnp.zeros((T, DP), jnp.bfloat16).at[:, :d_in].set(x.astype(jnp.bfloat16))
    tok, tkv, tki, new_state = rnnt_joiner_step(xb, state, w_fused, best_n=best_n)
    return tok[:, 0], tki[0, :best_n], tkv[0, :best_n], new_state


# ---------------- Streamer wrapper (glue, mirrors the nn.Module) ----------

class TextStreamer:
    def __init__(self, params, beam_width=20, best_n=10, full_hypo=False):
        wenc, wpred, b, wout = params
        D, H = wenc.shape
        V = wout.shape[1]
        assert wpred.shape == (H, H) and b.shape == (1, H)
        assert H == V and H % 128 == 0, "fused weight layout assumes lane-aligned H == V"
        DP = ((max(D, 128) + 127) // 128) * 128
        rows = DP + 2 * H + BIAS_ROWS
        w = jnp.zeros((rows, H), jnp.float32)
        w = w.at[:D, :].set(wenc)                       # W_enc, zero-padded rows D..DP
        w = w.at[DP:DP + H, :].set(wpred)               # W_pred
        w = w.at[DP + H:DP + 2 * H, :].set(wout)        # W_out
        w = w.at[DP + 2 * H:rows, :].set(jnp.broadcast_to(b, (BIAS_ROWS, H)))
        self.w_fused = w.astype(jnp.bfloat16)           # single bf16 weight buffer
        self.D, self.DP, self.H, self.V = D, DP, H, V

        self.beam_width = beam_width
        self.best_n = best_n
        self.full_hypo = full_hypo
        self.state_ = None
        self.hypos_ = None
        self.text = ''
        self.latency_history = []
        self.latency_history_names = ['beam_search']
        # whole streaming step under one jit: one XLA dispatch per chunk
        self._step = jax.jit(functools.partial(_streaming_step, d_in=D, best_n=best_n))

    def clear_cache(self):
        self.state_ = None
        self.hypos_ = None
        self.text = ''
        self.latency_history = []

    def forward(self, x):
        # TODO(synk): full beam-search hypothesis expansion/pruning and the
        # token->string decoder are dynamic, string-valued ops with no clean
        # Pallas equivalent; greedy per-frame tokens + in-kernel top-k scores of
        # the final frame stand in for the hypothesis list.
        times = []
        if x is not None:
            start = time.perf_counter()
            state = self.state_ if self.state_ is not None \
                else jnp.zeros((1, self.H), jnp.float32)
            toks, ids, scores, new_state = self._step(
                jnp.asarray(x, jnp.float32), state, self.w_fused)
            self.state_ = new_state
            self.hypos_ = (ids, scores)
            self.text = toks                     # per-frame greedy token ids ("text")
            times.append(time.perf_counter() - start)
        else:
            times.append(0.0)
        self.latency_history.append(times)
        return self.text

    __call__ = forward


# ---------------- main ----------------------------------------------------

if __name__ == "__main__":
    T, D, H, V = 256, 32, 128, 128   # frame chunk, feature, hidden, vocab
    BEST_N = 10

    key = jax.random.PRNGKey(0)
    k_x, k_x2, k_we, k_wp, k_b, k_wo = jax.random.split(key, 6)
    x = jax.random.normal(k_x, (T, D), jnp.float32)
    wenc = jax.random.normal(k_we, (D, H), jnp.float32) * 0.1
    wpred = jax.random.normal(k_wp, (H, H), jnp.float32) * 0.1
    b = jax.random.normal(k_b, (1, H), jnp.float32) * 0.1
    wout = jax.random.normal(k_wo, (H, V), jnp.float32) * 0.1

    streamer = TextStreamer((wenc, wpred, b, wout), beam_width=20, best_n=BEST_N)
    toks = streamer(x)
    jax.block_until_ready(toks)
    jax.block_until_ready(streamer.state_)

    # ---- correctness check vs plain-JAX reference (same bf16/f32 recipe) ----
    DP = streamer.DP
    x_bf = jnp.zeros((T, DP), jnp.bfloat16).at[:, :D].set(x.astype(jnp.bfloat16))
    wenc_bf = jnp.zeros((DP, H), jnp.bfloat16).at[:D, :].set(wenc.astype(jnp.bfloat16))
    wpred_bf = wpred.astype(jnp.bfloat16)
    wout_bf = wout.astype(jnp.bfloat16)
    b_f = b.astype(jnp.bfloat16).astype(jnp.float32)
    h0 = jnp.zeros((1, H), jnp.float32)
    enc = jnp.dot(x_bf, wenc_bf, preferred_element_type=jnp.float32)
    pred = jnp.dot(h0.astype(jnp.bfloat16), wpred_bf, preferred_element_type=jnp.float32)
    joint = jnp.tanh(enc + pred + b_f)
    logits = jnp.dot(joint.astype(jnp.bfloat16), wout_bf, preferred_element_type=jnp.float32)
    logp = logits - jax.scipy.special.logsumexp(logits, axis=-1, keepdims=True)

    logits_np = np.asarray(logits, np.float32)
    toks_np = np.asarray(toks)
    picked = logits_np[np.arange(T), toks_np]
    assert np.all(picked >= logits_np.max(axis=-1) - 1e-3), "greedy token mismatch"

    ids_np = np.asarray(streamer.hypos_[0])
    scores_np = np.asarray(streamer.hypos_[1])
    ref_vals, _ = jax.lax.top_k(logp[-1], BEST_N)
    assert np.allclose(scores_np, np.asarray(ref_vals), atol=2e-3), "top-k scores mismatch"
    logp_last = np.asarray(logp[-1])
    assert np.allclose(logp_last[ids_np], scores_np, atol=2e-3), "top-k ids inconsistent"
    assert np.allclose(np.asarray(streamer.state_), np.asarray(joint[-1:, :]),
                       atol=2e-3), "state mismatch"

    # second streaming chunk exercises the recurrence + in-place state aliasing
    x2 = jax.random.normal(k_x2, (T, D), jnp.float32)
    toks2 = streamer(x2)
    jax.block_until_ready(toks2)
    jax.block_until_ready(streamer.state_)

    print("KERNEL_OK")
</pallas_src>

<mosaic_0001>
module attributes {stable_mosaic.version = 11 : i64} {
  func.func @rnnt_joiner_kernel(%arg0: i32, %arg1: memref<128x128xbf16, #tpu.memory_space<vmem>>, %arg2: memref<1x128xf32, #tpu.memory_space<vmem>>, %arg3: memref<400x128xbf16, #tpu.memory_space<vmem>>, %arg4: memref<128x128xi32, #tpu.memory_space<vmem>>, %arg5: memref<1x128xf32, #tpu.memory_space<vmem>>, %arg6: memref<1x128xi32, #tpu.memory_space<vmem>>, %arg7: memref<1x128xf32, #tpu.memory_space<vmem>>) attributes {dimension_semantics = [#tpu.dimension_semantics<arbitrary>], iteration_bounds = array<i64: 2>, scalar_prefetch = 0 : i64, scratch_operands = 0 : i64, tpu.core_type = #tpu.core_type<tc>, window_params = [{transform_indices = @transform_0, window_bounds = array<i64: 128, 128>}, {pipeline_mode = #tpu.pipeline_mode<synchronous>, transform_indices = @transform_1, window_bounds = array<i64: 1, 128>}, {pipeline_mode = #tpu.pipeline_mode<synchronous>, transform_indices = @transform_2, window_bounds = array<i64: 400, 128>}, {transform_indices = @transform_3, window_bounds = array<i64: 128, 128>}, {pipeline_mode = #tpu.pipeline_mode<synchronous>, transform_indices = @transform_4, window_bounds = array<i64: 1, 128>}, {pipeline_mode = #tpu.pipeline_mode<synchronous>, transform_indices = @transform_5, window_bounds = array<i64: 1, 128>}, {pipeline_mode = #tpu.pipeline_mode<synchronous>, transform_indices = @transform_6, window_bounds = array<i64: 1, 128>}]} {
    %c0 = arith.constant 0 : index
    %c0_0 = arith.constant 0 : index
    %0 = vector.load %arg3[%c0, %c0_0] : memref<400x128xbf16, #tpu.memory_space<vmem>>, vector<128x128xbf16>
    %c128 = arith.constant 128 : index
    %c0_1 = arith.constant 0 : index
    %1 = vector.load %arg3[%c128, %c0_1] : memref<400x128xbf16, #tpu.memory_space<vmem>>, vector<128x128xbf16>
    %c256 = arith.constant 256 : index
    %c0_2 = arith.constant 0 : index
    %2 = vector.load %arg3[%c256, %c0_2] : memref<400x128xbf16, #tpu.memory_space<vmem>>, vector<128x128xbf16>
    %c384 = arith.constant 384 : index
    %c0_3 = arith.constant 0 : index
    %3 = vector.load %arg3[%c384, %c0_3] : memref<400x128xbf16, #tpu.memory_space<vmem>>, vector<16x128xbf16>
    %4 = vector.extract_strided_slice %3 {offsets = [0, 0], sizes = [1, 128], strides = [1, 1]} : vector<16x128xbf16> to vector<1x128xbf16>
    %5 = arith.extf %4 : vector<1x128xbf16> to vector<1x128xf32>
    %c0_4 = arith.constant 0 : index
    %c0_5 = arith.constant 0 : index
    %6 = vector.load %arg1[%c0_4, %c0_5] : memref<128x128xbf16, #tpu.memory_space<vmem>>, vector<128x128xbf16>
    %cst = arith.constant dense<0.000000e+00> : vector<128x128xf32>
    %7 = tpu.matmul %6, %0, %cst {dimension_numbers = #tpu.dot_dimension_numbers<[1], [0], [0], [1], [0, 0, 1, 1], [], []>} : vector<128x128xbf16>, vector<128x128xbf16>, vector<128x128xf32> -> vector<128x128xf32>
    %c0_6 = arith.constant 0 : index
    %c0_7 = arith.constant 0 : index
    %8 = vector.load %arg2[%c0_6, %c0_7] : memref<1x128xf32, #tpu.memory_space<vmem>>, vector<1x128xf32>
    %9 = arith.truncf %8 : vector<1x128xf32> to vector<1x128xbf16>
    %cst_8 = arith.constant dense<0.000000e+00> : vector<1x128xf32>
    %10 = tpu.matmul %9, %1, %cst_8 {dimension_numbers = #tpu.dot_dimension_numbers<[1], [0], [0], [1], [0, 0, 1, 1], [], []>} : vector<1x128xbf16>, vector<128x128xbf16>, vector<1x128xf32> -> vector<1x128xf32>
    %11 = vector.broadcast %10 : vector<1x128xf32> to vector<128x128xf32>
    %12 = arith.addf %7, %11 : vector<128x128xf32>
    %13 = vector.broadcast %5 : vector<1x128xf32> to vector<128x128xf32>
    %14 = arith.addf %12, %13 : vector<128x128xf32>
    %15 = math.tanh %14 : vector<128x128xf32>
    %16 = arith.truncf %15 : vector<128x128xf32> to vector<128x128xbf16>
    %cst_9 = arith.constant dense<0.000000e+00> : vector<128x128xf32>
    %17 = tpu.matmul %16, %2, %cst_9 {dimension_numbers = #tpu.dot_dimension_numbers<[1], [0], [0], [1], [0, 0, 1, 1], [], []>} : vector<128x128xbf16>, vector<128x128xbf16>, vector<128x128xf32> -> vector<128x128xf32>
    %cst_10 = arith.constant dense<0xFF800000> : vector<128xf32>
    %18 = vector.multi_reduction <maximumf>, %17, %cst_10 [1] : vector<128x128xf32> to vector<128xf32>
    %19 = vector.shape_cast %18 : vector<128xf32> to vector<128x1xf32>
    %20 = tpu.iota {dimensions = array<i32: 1>} : vector<128x128xi32>
    %21 = vector.broadcast %19 : vector<128x1xf32> to vector<128x128xf32>
    %22 = arith.cmpf oeq, %17, %21 : vector<128x128xf32>
    %c128_i32 = arith.constant 128 : i32
    %23 = vector.broadcast %c128_i32 : i32 to vector<128x128xi32>
    %24 = arith.select %22, %20, %23 : vector<128x128xi1>, vector<128x128xi32>
    %cst_11 = arith.constant dense<2147483647> : vector<128xi32>
    %25 = vector.multi_reduction <minsi>, %24, %cst_11 [1] : vector<128x128xi32> to vector<128xi32>
    %26 = vector.shape_cast %25 : vector<128xi32> to vector<128x1xi32>
    %27 = vector.shape_cast %26 : vector<128x1xi32> to vector<128x1xi32>
    %28 = vector.broadcast %27 : vector<128x1xi32> to vector<128x128xi32>
    %c0_12 = arith.constant 0 : index
    %c0_13 = arith.constant 0 : index
    %29 = vector.load %arg4[%c0_12, %c0_13] : memref<128x128xi32, #tpu.memory_space<vmem>>, vector<128x128xi32>
    tpu.vector_store %arg4[%c0_12, %c0_13], %28 {strides = array<i32>} : memref<128x128xi32, #tpu.memory_space<vmem>>, vector<128x128xi32>,
    %c1_i32 = arith.constant 1 : i32
    %30 = arith.cmpi eq, %arg0, %c1_i32 : i32
    %31 = arith.extui %30 : i1 to i32
    %c0_i32 = arith.constant 0 : i32
    %32 = arith.cmpi ne, %31, %c0_i32 : i32
    scf.if %32 {
      %33 = vector.extract_strided_slice %17 {offsets = [127, 0], sizes = [1, 128], strides = [1, 1]} : vector<128x128xf32> to vector<1x128xf32>
      %34 = vector.extract_strided_slice %19 {offsets = [127, 0], sizes = [1, 1], strides = [1, 1]} : vector<128x1xf32> to vector<1x1xf32>
      %35 = vector.broadcast %34 : vector<1x1xf32> to vector<1x128xf32>
      %36 = arith.subf %33, %35 : vector<1x128xf32>
      %37 = math.exp %36 : vector<1x128xf32>
      %cst_14 = arith.constant dense<0.000000e+00> : vector<1xf32>
      %38 = vector.multi_reduction <add>, %37, %cst_14 [1] : vector<1x128xf32> to vector<1xf32>
      %39 = vector.shape_cast %38 : vector<1xf32> to vector<1x1xf32>
      %40 = math.log %39 : vector<1x1xf32>
      %41 = arith.addf %34, %40 : vector<1x1xf32>
      %42 = vector.broadcast %41 : vector<1x1xf32> to vector<1x128xf32>
      %43 = arith.subf %33, %42 : vector<1x128xf32>
      %44 = tpu.iota {dimensions = array<i32: 1>} : vector<1x128xi32>
      %cst_15 = arith.constant 0xFF800000 : f32
      %45 = vector.broadcast %cst_15 : f32 to vector<1x128xf32>
      %c-1_i32 = arith.constant -1 : i32
      %46 = vector.broadcast %c-1_i32 : i32 to vector<1x128xi32>
      %cst_16 = arith.constant dense<0xFF800000> : vector<1xf32>
      %47 = vector.multi_reduction <maximumf>, %43, %cst_16 [1] : vector<1x128xf32> to vector<1xf32>
      %48 = vector.shape_cast %47 : vector<1xf32> to vector<1x1xf32>
      %49 = vector.broadcast %48 : vector<1x1xf32> to vector<1x128xf32>
      %50 = arith.cmpf oeq, %43, %49 : vector<1x128xf32>
      %c128_i32_17 = arith.constant 128 : i32
      %51 = vector.broadcast %c128_i32_17 : i32 to vector<1x128xi32>
      %52 = arith.select %50, %44, %51 : vector<1x128xi1>, vector<1x128xi32>
      %cst_18 = arith.constant dense<2147483647> : vector<1xi32>
      %53 = vector.multi_reduction <minsi>, %52, %cst_18 [1] : vector<1x128xi32> to vector<1xi32>
      %54 = vector.shape_cast %53 : vector<1xi32> to vector<1x1xi32>
      %c0_i32_19 = arith.constant 0 : i32
      %55 = vector.broadcast %c0_i32_19 : i32 to vector<1x128xi32>
      %56 = arith.cmpi eq, %44, %55 : vector<1x128xi32>
      %57 = vector.shape_cast %48 : vector<1x1xf32> to vector<1x1xf32>
      %58 = vector.broadcast %57 : vector<1x1xf32> to vector<1x128xf32>
      %59 = arith.select %56, %58, %45 : vector<1x128xi1>, vector<1x128xf32>
      %c0_i32_20 = arith.constant 0 : i32
      %60 = vector.broadcast %c0_i32_20 : i32 to vector<1x128xi32>
      %61 = arith.cmpi eq, %44, %60 : vector<1x128xi32>
      %62 = vector.shape_cast %54 : vector<1x1xi32> to vector<1x1xi32>
      %63 = vector.broadcast %62 : vector<1x1xi32> to vector<1x128xi32>
      %64 = arith.select %61, %63, %46 : vector<1x128xi1>, vector<1x128xi32>
      %65 = vector.broadcast %54 : vector<1x1xi32> to vector<1x128xi32>
      %66 = arith.cmpi eq, %44, %65 : vector<1x128xi32>
      %cst_21 = arith.constant 0xFF800000 : f32
      %67 = vector.broadcast %cst_21 : f32 to vector<1x128xf32>
      %68 = arith.select %66, %67, %43 : vector<1x128xi1>, vector<1x128xf32>
      %cst_22 = arith.constant dense<0xFF800000> : vector<1xf32>
      %69 = vector.multi_reduction <maximumf>, %68, %cst_22 [1] : vector<1x128xf32> to vector<1xf32>
      %70 = vector.shape_cast %69 : vector<1xf32> to vector<1x1xf32>
      %71 = vector.broadcast %70 : vector<1x1xf32> to vector<1x128xf32>
      %72 = arith.cmpf oeq, %68, %71 : vector<1x128xf32>
      %c128_i32_23 = arith.constant 128 : i32
      %73 = vector.broadcast %c128_i32_23 : i32 to vector<1x128xi32>
      %74 = arith.select %72, %44, %73 : vector<1x128xi1>, vector<1x128xi32>
      %cst_24 = arith.constant dense<2147483647> : vector<1xi32>
      %75 = vector.multi_reduction <minsi>, %74, %cst_24 [1] : vector<1x128xi32> to vector<1xi32>
      %76 = vector.shape_cast %75 : vector<1xi32> to vector<1x1xi32>
      %c1_i32_25 = arith.constant 1 : i32
      %77 = vector.broadcast %c1_i32_25 : i32 to vector<1x128xi32>
      %78 = arith.cmpi eq, %44, %77 : vector<1x128xi32>
      %79 = vector.shape_cast %70 : vector<1x1xf32> to vector<1x1xf32>
      %80 = vector.broadcast %79 : vector<1x1xf32> to vector<1x128xf32>
      %81 = arith.select %78, %80, %59 : vector<1x128xi1>, vector<1x128xf32>
      %c1_i32_26 = arith.constant 1 : i32
      %82 = vector.broadcast %c1_i32_26 : i32 to vector<1x128xi32>
      %83 = arith.cmpi eq, %44, %82 : vector<1x128xi32>
      %84 = vector.shape_cast %76 : vector<1x1xi32> to vector<1x1xi32>
      %85 = vector.broadcast %84 : vector<1x1xi32> to vector<1x128xi32>
      %86 = arith.select %83, %85, %64 : vector<1x128xi1>, vector<1x128xi32>
      %87 = vector.broadcast %76 : vector<1x1xi32> to vector<1x128xi32>
      %88 = arith.cmpi eq, %44, %87 : vector<1x128xi32>
      %cst_27 = arith.constant 0xFF800000 : f32
      %89 = vector.broadcast %cst_27 : f32 to vector<1x128xf32>
      %90 = arith.select %88, %89, %68 : vector<1x128xi1>, vector<1x128xf32>
      %cst_28 = arith.constant dense<0xFF800000> : vector<1xf32>
      %91 = vector.multi_reduction <maximumf>, %90, %cst_28 [1] : vector<1x128xf32> to vector<1xf32>
      %92 = vector.shape_cast %91 : vector<1xf32> to vector<1x1xf32>
      %93 = vector.broadcast %92 : vector<1x1xf32> to vector<1x128xf32>
      %94 = arith.cmpf oeq, %90, %93 : vector<1x128xf32>
      %c128_i32_29 = arith.constant 128 : i32
      %95 = vector.broadcast %c128_i32_29 : i32 to vector<1x128xi32>
      %96 = arith.select %94, %44, %95 : vector<1x128xi1>, vector<1x128xi32>
      %cst_30 = arith.constant dense<2147483647> : vector<1xi32>
      %97 = vector.multi_reduction <minsi>, %96, %cst_30 [1] : vector<1x128xi32> to vector<1xi32>
      %98 = vector.shape_cast %97 : vector<1xi32> to vector<1x1xi32>
      %c2_i32 = arith.constant 2 : i32
      %99 = vector.broadcast %c2_i32 : i32 to vector<1x128xi32>
      %100 = arith.cmpi eq, %44, %99 : vector<1x128xi32>
      %101 = vector.shape_cast %92 : vector<1x1xf32> to vector<1x1xf32>
      %102 = vector.broadcast %101 : vector<1x1xf32> to vector<1x128xf32>
      %103 = arith.select %100, %102, %81 : vector<1x128xi1>, vector<1x128xf32>
      %c2_i32_31 = arith.constant 2 : i32
      %104 = vector.broadcast %c2_i32_31 : i32 to vector<1x128xi32>
      %105 = arith.cmpi eq, %44, %104 : vector<1x128xi32>
      %106 = vector.shape_cast %98 : vector<1x1xi32> to vector<1x1xi32>
      %107 = vector.broadcast %106 : vector<1x1xi32> to vector<1x128xi32>
      %108 = arith.select %105, %107, %86 : vector<1x128xi1>, vector<1x128xi32>
      %109 = vector.broadcast %98 : vector<1x1xi32> to vector<1x128xi32>
      %110 = arith.cmpi eq, %44, %109 : vector<1x128xi32>
      %cst_32 = arith.constant 0xFF800000 : f32
      %111 = vector.broadcast %cst_32 : f32 to vector<1x128xf32>
      %112 = arith.select %110, %111, %90 : vector<1x128xi1>, vector<1x128xf32>
      %cst_33 = arith.constant dense<0xFF800000> : vector<1xf32>
      %113 = vector.multi_reduction <maximumf>, %112, %cst_33 [1] : vector<1x128xf32> to vector<1xf32>
      %114 = vector.shape_cast %113 : vector<1xf32> to vector<1x1xf32>
      %115 = vector.broadcast %114 : vector<1x1xf32> to vector<1x128xf32>
      %116 = arith.cmpf oeq, %112, %115 : vector<1x128xf32>
      %c128_i32_34 = arith.constant 128 : i32
      %117 = vector.broadcast %c128_i32_34 : i32 to vector<1x128xi32>
      %118 = arith.select %116, %44, %117 : vector<1x128xi1>, vector<1x128xi32>
      %cst_35 = arith.constant dense<2147483647> : vector<1xi32>
      %119 = vector.multi_reduction <minsi>, %118, %cst_35 [1] : vector<1x128xi32> to vector<1xi32>
      %120 = vector.shape_cast %119 : vector<1xi32> to vector<1x1xi32>
      %c3_i32 = arith.constant 3 : i32
      %121 = vector.broadcast %c3_i32 : i32 to vector<1x128xi32>
      %122 = arith.cmpi eq, %44, %121 : vector<1x128xi32>
      %123 = vector.shape_cast %114 : vector<1x1xf32> to vector<1x1xf32>
      %124 = vector.broadcast %123 : vector<1x1xf32> to vector<1x128xf32>
      %125 = arith.select %122, %124, %103 : vector<1x128xi1>, vector<1x128xf32>
      %c3_i32_36 = arith.constant 3 : i32
      %126 = vector.broadcast %c3_i32_36 : i32 to vector<1x128xi32>
      %127 = arith.cmpi eq, %44, %126 : vector<1x128xi32>
      %128 = vector.shape_cast %120 : vector<1x1xi32> to vector<1x1xi32>
      %129 = vector.broadcast %128 : vector<1x1xi32> to vector<1x128xi32>
      %130 = arith.select %127, %129, %108 : vector<1x128xi1>, vector<1x128xi32>
      %131 = vector.broadcast %120 : vector<1x1xi32> to vector<1x128xi32>
      %132 = arith.cmpi eq, %44, %131 : vector<1x128xi32>
      %cst_37 = arith.constant 0xFF800000 : f32
      %133 = vector.broadcast %cst_37 : f32 to vector<1x128xf32>
      %134 = arith.select %132, %133, %112 : vector<1x128xi1>, vector<1x128xf32>
      %cst_38 = arith.constant dense<0xFF800000> : vector<1xf32>
      %135 = vector.multi_reduction <maximumf>, %134, %cst_38 [1] : vector<1x128xf32> to vector<1xf32>
      %136 = vector.shape_cast %135 : vector<1xf32> to vector<1x1xf32>
      %137 = vector.broadcast %136 : vector<1x1xf32> to vector<1x128xf32>
      %138 = arith.cmpf oeq, %134, %137 : vector<1x128xf32>
      %c128_i32_39 = arith.constant 128 : i32
      %139 = vector.broadcast %c128_i32_39 : i32 to vector<1x128xi32>
      %140 = arith.select %138, %44, %139 : vector<1x128xi1>, vector<1x128xi32>
      %cst_40 = arith.constant dense<2147483647> : vector<1xi32>
      %141 = vector.multi_reduction <minsi>, %140, %cst_40 [1] : vector<1x128xi32> to vector<1xi32>
      %142 = vector.shape_cast %141 : vector<1xi32> to vector<1x1xi32>
      %c4_i32 = arith.constant 4 : i32
      %143 = vector.broadcast %c4_i32 : i32 to vector<1x128xi32>
      %144 = arith.cmpi eq, %44, %143 : vector<1x128xi32>
      %145 = vector.shape_cast %136 : vector<1x1xf32> to vector<1x1xf32>
      %146 = vector.broadcast %145 : vector<1x1xf32> to vector<1x128xf32>
      %147 = arith.select %144, %146, %125 : vector<1x128xi1>, vector<1x128xf32>
      %c4_i32_41 = arith.constant 4 : i32
      %148 = vector.broadcast %c4_i32_41 : i32 to vector<1x128xi32>
      %149 = arith.cmpi eq, %44, %148 : vector<1x128xi32>
      %150 = vector.shape_cast %142 : vector<1x1xi32> to vector<1x1xi32>
      %151 = vector.broadcast %150 : vector<1x1xi32> to vector<1x128xi32>
      %152 = arith.select %149, %151, %130 : vector<1x128xi1>, vector<1x128xi32>
      %153 = vector.broadcast %142 : vector<1x1xi32> to vector<1x128xi32>
      %154 = arith.cmpi eq, %44, %153 : vector<1x128xi32>
      %cst_42 = arith.constant 0xFF800000 : f32
      %155 = vector.broadcast %cst_42 : f32 to vector<1x128xf32>
      %156 = arith.select %154, %155, %134 : vector<1x128xi1>, vector<1x128xf32>
      %cst_43 = arith.constant dense<0xFF800000> : vector<1xf32>
      %157 = vector.multi_reduction <maximumf>, %156, %cst_43 [1] : vector<1x128xf32> to vector<1xf32>
      %158 = vector.shape_cast %157 : vector<1xf32> to vector<1x1xf32>
      %159 = vector.broadcast %158 : vector<1x1xf32> to vector<1x128xf32>
      %160 = arith.cmpf oeq, %156, %159 : vector<1x128xf32>
      %c128_i32_44 = arith.constant 128 : i32
      %161 = vector.broadcast %c128_i32_44 : i32 to vector<1x128xi32>
      %162 = arith.select %160, %44, %161 : vector<1x128xi1>, vector<1x128xi32>
      %cst_45 = arith.constant dense<2147483647> : vector<1xi32>
      %163 = vector.multi_reduction <minsi>, %162, %cst_45 [1] : vector<1x128xi32> to vector<1xi32>
      %164 = vector.shape_cast %163 : vector<1xi32> to vector<1x1xi32>
      %c5_i32 = arith.constant 5 : i32
      %165 = vector.broadcast %c5_i32 : i32 to vector<1x128xi32>
      %166 = arith.cmpi eq, %44, %165 : vector<1x128xi32>
      %167 = vector.shape_cast %158 : vector<1x1xf32> to vector<1x1xf32>
      %168 = vector.broadcast %167 : vector<1x1xf32> to vector<1x128xf32>
      %169 = arith.select %166, %168, %147 : vector<1x128xi1>, vector<1x128xf32>
      %c5_i32_46 = arith.constant 5 : i32
      %170 = vector.broadcast %c5_i32_46 : i32 to vector<1x128xi32>
      %171 = arith.cmpi eq, %44, %170 : vector<1x128xi32>
      %172 = vector.shape_cast %164 : vector<1x1xi32> to vector<1x1xi32>
      %173 = vector.broadcast %172 : vector<1x1xi32> to vector<1x128xi32>
      %174 = arith.select %171, %173, %152 : vector<1x128xi1>, vector<1x128xi32>
      %175 = vector.broadcast %164 : vector<1x1xi32> to vector<1x128xi32>
      %176 = arith.cmpi eq, %44, %175 : vector<1x128xi32>
      %cst_47 = arith.constant 0xFF800000 : f32
      %177 = vector.broadcast %cst_47 : f32 to vector<1x128xf32>
      %178 = arith.select %176, %177, %156 : vector<1x128xi1>, vector<1x128xf32>
      %cst_48 = arith.constant dense<0xFF800000> : vector<1xf32>
      %179 = vector.multi_reduction <maximumf>, %178, %cst_48 [1] : vector<1x128xf32> to vector<1xf32>
      %180 = vector.shape_cast %179 : vector<1xf32> to vector<1x1xf32>
      %181 = vector.broadcast %180 : vector<1x1xf32> to vector<1x128xf32>
      %182 = arith.cmpf oeq, %178, %181 : vector<1x128xf32>
      %c128_i32_49 = arith.constant 128 : i32
      %183 = vector.broadcast %c128_i32_49 : i32 to vector<1x128xi32>
      %184 = arith.select %182, %44, %183 : vector<1x128xi1>, vector<1x128xi32>
      %cst_50 = arith.constant dense<2147483647> : vector<1xi32>
      %185 = vector.multi_reduction <minsi>, %184, %cst_50 [1] : vector<1x128xi32> to vector<1xi32>
      %186 = vector.shape_cast %185 : vector<1xi32> to vector<1x1xi32>
      %c6_i32 = arith.constant 6 : i32
      %187 = vector.broadcast %c6_i32 : i32 to vector<1x128xi32>
      %188 = arith.cmpi eq, %44, %187 : vector<1x128xi32>
      %189 = vector.shape_cast %180 : vector<1x1xf32> to vector<1x1xf32>
      %190 = vector.broadcast %189 : vector<1x1xf32> to vector<1x128xf32>
      %191 = arith.select %188, %190, %169 : vector<1x128xi1>, vector<1x128xf32>
      %c6_i32_51 = arith.constant 6 : i32
      %192 = vector.broadcast %c6_i32_51 : i32 to vector<1x128xi32>
      %193 = arith.cmpi eq, %44, %192 : vector<1x128xi32>
      %194 = vector.shape_cast %186 : vector<1x1xi32> to vector<1x1xi32>
      %195 = vector.broadcast %194 : vector<1x1xi32> to vector<1x128xi32>
      %196 = arith.select %193, %195, %174 : vector<1x128xi1>, vector<1x128xi32>
      %197 = vector.broadcast %186 : vector<1x1xi32> to vector<1x128xi32>
      %198 = arith.cmpi eq, %44, %197 : vector<1x128xi32>
      %cst_52 = arith.constant 0xFF800000 : f32
      %199 = vector.broadcast %cst_52 : f32 to vector<1x128xf32>
      %200 = arith.select %198, %199, %178 : vector<1x128xi1>, vector<1x128xf32>
      %cst_53 = arith.constant dense<0xFF800000> : vector<1xf32>
      %201 = vector.multi_reduction <maximumf>, %200, %cst_53 [1] : vector<1x128xf32> to vector<1xf32>
      %202 = vector.shape_cast %201 : vector<1xf32> to vector<1x1xf32>
      %203 = vector.broadcast %202 : vector<1x1xf32> to vector<1x128xf32>
      %204 = arith.cmpf oeq, %200, %203 : vector<1x128xf32>
      %c128_i32_54 = arith.constant 128 : i32
      %205 = vector.broadcast %c128_i32_54 : i32 to vector<1x128xi32>
      %206 = arith.select %204, %44, %205 : vector<1x128xi1>, vector<1x128xi32>
      %cst_55 = arith.constant dense<2147483647> : vector<1xi32>
      %207 = vector.multi_reduction <minsi>, %206, %cst_55 [1] : vector<1x128xi32> to vector<1xi32>
      %208 = vector.shape_cast %207 : vector<1xi32> to vector<1x1xi32>
      %c7_i32 = arith.constant 7 : i32
      %209 = vector.broadcast %c7_i32 : i32 to vector<1x128xi32>
      %210 = arith.cmpi eq, %44, %209 : vector<1x128xi32>
      %211 = vector.shape_cast %202 : vector<1x1xf32> to vector<1x1xf32>
      %212 = vector.broadcast %211 : vector<1x1xf32> to vector<1x128xf32>
      %213 = arith.select %210, %212, %191 : vector<1x128xi1>, vector<1x128xf32>
      %c7_i32_56 = arith.constant 7 : i32
      %214 = vector.broadcast %c7_i32_56 : i32 to vector<1x128xi32>
      %215 = arith.cmpi eq, %44, %214 : vector<1x128xi32>
      %216 = vector.shape_cast %208 : vector<1x1xi32> to vector<1x1xi32>
      %217 = vector.broadcast %216 : vector<1x1xi32> to vector<1x128xi32>
      %218 = arith.select %215, %217, %196 : vector<1x128xi1>, vector<1x128xi32>
      %219 = vector.broadcast %208 : vector<1x1xi32> to vector<1x128xi32>
      %220 = arith.cmpi eq, %44, %219 : vector<1x128xi32>
      %cst_57 = arith.constant 0xFF800000 : f32
      %221 = vector.broadcast %cst_57 : f32 to vector<1x128xf32>
      %222 = arith.select %220, %221, %200 : vector<1x128xi1>, vector<1x128xf32>
      %cst_58 = arith.constant dense<0xFF800000> : vector<1xf32>
      %223 = vector.multi_reduction <maximumf>, %222, %cst_58 [1] : vector<1x128xf32> to vector<1xf32>
      %224 = vector.shape_cast %223 : vector<1xf32> to vector<1x1xf32>
      %225 = vector.broadcast %224 : vector<1x1xf32> to vector<1x128xf32>
      %226 = arith.cmpf oeq, %222, %225 : vector<1x128xf32>
      %c128_i32_59 = arith.constant 128 : i32
      %227 = vector.broadcast %c128_i32_59 : i32 to vector<1x128xi32>
      %228 = arith.select %226, %44, %227 : vector<1x128xi1>, vector<1x128xi32>
      %cst_60 = arith.constant dense<2147483647> : vector<1xi32>
      %229 = vector.multi_reduction <minsi>, %228, %cst_60 [1] : vector<1x128xi32> to vector<1xi32>
      %230 = vector.shape_cast %229 : vector<1xi32> to vector<1x1xi32>
      %c8_i32 = arith.constant 8 : i32
      %231 = vector.broadcast %c8_i32 : i32 to vector<1x128xi32>
      %232 = arith.cmpi eq, %44, %231 : vector<1x128xi32>
      %233 = vector.shape_cast %224 : vector<1x1xf32> to vector<1x1xf32>
      %234 = vector.broadcast %233 : vector<1x1xf32> to vector<1x128xf32>
      %235 = arith.select %232, %234, %213 : vector<1x128xi1>, vector<1x128xf32>
      %c8_i32_61 = arith.constant 8 : i32
      %236 = vector.broadcast %c8_i32_61 : i32 to vector<1x128xi32>
      %237 = arith.cmpi eq, %44, %236 : vector<1x128xi32>
      %238 = vector.shape_cast %230 : vector<1x1xi32> to vector<1x1xi32>
      %239 = vector.broadcast %238 : vector<1x1xi32> to vector<1x128xi32>
      %240 = arith.select %237, %239, %218 : vector<1x128xi1>, vector<1x128xi32>
      %241 = vector.broadcast %230 : vector<1x1xi32> to vector<1x128xi32>
      %242 = arith.cmpi eq, %44, %241 : vector<1x128xi32>
      %cst_62 = arith.constant 0xFF800000 : f32
      %243 = vector.broadcast %cst_62 : f32 to vector<1x128xf32>
      %244 = arith.select %242, %243, %222 : vector<1x128xi1>, vector<1x128xf32>
      %cst_63 = arith.constant dense<0xFF800000> : vector<1xf32>
      %245 = vector.multi_reduction <maximumf>, %244, %cst_63 [1] : vector<1x128xf32> to vector<1xf32>
      %246 = vector.shape_cast %245 : vector<1xf32> to vector<1x1xf32>
      %247 = vector.broadcast %246 : vector<1x1xf32> to vector<1x128xf32>
      %248 = arith.cmpf oeq, %244, %247 : vector<1x128xf32>
      %c128_i32_64 = arith.constant 128 : i32
      %249 = vector.broadcast %c128_i32_64 : i32 to vector<1x128xi32>
      %250 = arith.select %248, %44, %249 : vector<1x128xi1>, vector<1x128xi32>
      %cst_65 = arith.constant dense<2147483647> : vector<1xi32>
      %251 = vector.multi_reduction <minsi>, %250, %cst_65 [1] : vector<1x128xi32> to vector<1xi32>
      %252 = vector.shape_cast %251 : vector<1xi32> to vector<1x1xi32>
      %c9_i32 = arith.constant 9 : i32
      %253 = vector.broadcast %c9_i32 : i32 to vector<1x128xi32>
      %254 = arith.cmpi eq, %44, %253 : vector<1x128xi32>
      %255 = vector.shape_cast %246 : vector<1x1xf32> to vector<1x1xf32>
      %256 = vector.broadcast %255 : vector<1x1xf32> to vector<1x128xf32>
      %257 = arith.select %254, %256, %235 : vector<1x128xi1>, vector<1x128xf32>
      %c9_i32_66 = arith.constant 9 : i32
      %258 = vector.broadcast %c9_i32_66 : i32 to vector<1x128xi32>
      %259 = arith.cmpi eq, %44, %258 : vector<1x128xi32>
      %260 = vector.shape_cast %252 : vector<1x1xi32> to vector<1x1xi32>
      %261 = vector.broadcast %260 : vector<1x1xi32> to vector<1x128xi32>
      %262 = arith.select %259, %261, %240 : vector<1x128xi1>, vector<1x128xi32>
      %c0_67 = arith.constant 0 : index
      %c0_68 = arith.constant 0 : index
      %263 = vector.load %arg5[%c0_67, %c0_68] : memref<1x128xf32, #tpu.memory_space<vmem>>, vector<1x128xf32>
      tpu.vector_store %arg5[%c0_67, %c0_68], %257 {strides = array<i32>} : memref<1x128xf32, #tpu.memory_space<vmem>>, vector<1x128xf32>,
      %c0_69 = arith.constant 0 : index
      %c0_70 = arith.constant 0 : index
      %264 = vector.load %arg6[%c0_69, %c0_70] : memref<1x128xi32, #tpu.memory_space<vmem>>, vector<1x128xi32>
      tpu.vector_store %arg6[%c0_69, %c0_70], %262 {strides = array<i32>} : memref<1x128xi32, #tpu.memory_space<vmem>>, vector<1x128xi32>,
      %265 = vector.extract_strided_slice %15 {offsets = [127, 0], sizes = [1, 128], strides = [1, 1]} : vector<128x128xf32> to vector<1x128xf32>
      %c0_71 = arith.constant 0 : index
      %c0_72 = arith.constant 0 : index
      %266 = vector.load %arg7[%c0_71, %c0_72] : memref<1x128xf32, #tpu.memory_space<vmem>>, vector<1x128xf32>
      tpu.vector_store %arg7[%c0_71, %c0_72], %265 {strides = array<i32>} : memref<1x128xf32, #tpu.memory_space<vmem>>, vector<1x128xf32>,
    } else {
    }
    return
  }
  func.func @transform_0(%arg0: i32) -> (i32, i32) {
    %c0_i32 = arith.constant 0 : i32
    %c0_i32_0 = arith.constant 0 : i32
    return %arg0, %c0_i32 : i32, i32
  }
  func.func @transform_1(%arg0: i32) -> (i32, i32) {
    %c0_i32 = arith.constant 0 : i32
    %c0_i32_0 = arith.constant 0 : i32
    %c0_i32_1 = arith.constant 0 : i32
    return %c0_i32, %c0_i32_0 : i32, i32
  }
  func.func @transform_2(%arg0: i32) -> (i32, i32) {
    %c0_i32 = arith.constant 0 : i32
    %c0_i32_0 = arith.constant 0 : i32
    %c0_i32_1 = arith.constant 0 : i32
    return %c0_i32, %c0_i32_0 : i32, i32
  }
  func.func @transform_3(%arg0: i32) -> (i32, i32) {
    %c0_i32 = arith.constant 0 : i32
    %c0_i32_0 = arith.constant 0 : i32
    return %arg0, %c0_i32 : i32, i32
  }
  func.func @transform_4(%arg0: i32) -> (i32, i32) {
    %c0_i32 = arith.constant 0 : i32
    %c0_i32_0 = arith.constant 0 : i32
    %c0_i32_1 = arith.constant 0 : i32
    return %c0_i32, %c0_i32_0 : i32, i32
  }
  func.func @transform_5(%arg0: i32) -> (i32, i32) {
    %c0_i32 = arith.constant 0 : i32
    %c0_i32_0 = arith.constant 0 : i32
    %c0_i32_1 = arith.constant 0 : i32
    return %c0_i32, %c0_i32_0 : i32, i32
  }
  func.func @transform_6(%arg0: i32) -> (i32, i32) {
    %c0_i32 = arith.constant 0 : i32
    %c0_i32_0 = arith.constant 0 : i32
    %c0_i32_1 = arith.constant 0 : i32
    return %c0_i32, %c0_i32_0 : i32, i32
  }
}

</mosaic_0001>

<llo_original>
// kernel: _streaming_step.1
$region0: #{_streaming_step.1}
  #allocation0 [shape = 'u32[]', space=smem, size = 0x4, offset = 0x4, fixed_abs, tag = 'smem constant byte address 0x4 - core index']
  #allocation1 [shape = 'u32[144,128]{1,0:T(1,128)}', space=vmem, size = 0x12000, scoped, tag = 'internal scratch']
  %s0 = inlined_call_operand.vmem [shape: bf16[256,128], index: 0, kind: input, shape index: {}]
  %s1 = inlined_call_operand.vmem [shape: f32[1,128], index: 1, kind: input, shape index: {}, may-alias: {1,6}]
  %s2 = inlined_call_operand.vmem [shape: bf16[400,128], index: 2, kind: input, shape index: {}]
  %s3 = inlined_call_operand.vmem [shape: s32[256,128], index: 3, kind: output, shape index: {0}]
  %s4 = inlined_call_operand.vmem [shape: f32[1,128], index: 4, kind: output, shape index: {1}]
  %s5 = inlined_call_operand.vmem [shape: s32[1,128], index: 5, kind: output, shape index: {2}]
  %s6 = inlined_call_operand.vmem [shape: f32[1,128], index: 6, kind: output, shape index: {3}, may-alias: {1,6}]
  %7 = xla_tuple %s3, %s4, %s5, %s6
  %s8 = sld [smem:[#allocation0]]
  $region73: #{_streaming_step.1} parent=0
    _
  %s10 = ssub.s32 1, %s8
  %s11 = scalar_select 0, %s10, %s8
  loop: start=0, step=1, limit=4
  $region2: #{_streaming_step.1} parent=0 // loop_pre_header
    _
  $region3: #{_streaming_step.1} parent=0 // loop_header
    %s13 = sphi 0, %s17
    %p14 = scmp.ge.s32.totalorder %s13, 4
    %s23 = sphi 0, %s25
    %s26 = sphi 0, %s23
    %s27 = sphi 0, %s26
    %s43 = sphi 0, %s27
    %s47 = sphi 0, %s47
    %s49 = sphi 0, %s47
    %s50 = sphi 0, %s49
    %s64 = sphi 0, %s50
    %s68 = sphi 0, %s68
    %s70 = sphi 0, %s68
    %s71 = sphi 0, %s70
    %s85 = sphi 0, %s71
    %s91 = sphi 0, %s93
    %s94 = sphi 0, %s91
    %s95 = sphi 0, %s94
    %s111 = sphi 0, %s95
    %s115 = sphi 0, %s115
    %s117 = sphi 0, %s115
    %s118 = sphi 0, %s117
    %s132 = sphi 0, %s118
    %s136 = sphi 0, %s136
    %s138 = sphi 0, %s136
    %s139 = sphi 0, %s138
    %s153 = sphi 0, %s139
    %s157 = sphi 0, %s157
    %s159 = sphi 0, %s157
    %s160 = sphi 0, %s159
    %s174 = sphi 0, %s160
  $region4: #{_streaming_step.1} parent=0 // loop_header_branch
    %16 = sbr.rel (%p14) target = $region8
  $region5: #{_streaming_step.1} parent=0 // loop_body
    %s18 = ssub.s32 %s13, 1
    %s19 = ssub.s32 %s13, 2
    %s20 = sadd.s32 %s13, 1
    %s21 = ssub.s32 %s13, %s20
    %p22 = scmp.eq.s32.totalorder %s21, 0
    %s24 = sadd.s32 %s23, 1
    %s25 = scalar_select %p22, %s23, %s24
    %p28 = pneg %p22
    %p29 = scmp.eq.s32.totalorder %s13, 1
    %p30 = por %p28, %p29
    %p31 = scmp.ne.s32.totalorder %s23, %s26
    %p32 = scmp.eq.s32.totalorder %s13, 0
    %p33 = por %p31, %p32
    %p34 = scmp.ne.s32.totalorder %s23, %s26
    %p35 = scmp.eq.s32.totalorder %s18, 1
    %p36 = por %p34, %p35
    %p37 = scmp.ne.s32.totalorder %s26, %s27
    %p38 = scmp.eq.s32.totalorder %s18, 0
    %p39 = por %p37, %p38
    %p40 = scmp.ne.s32.totalorder %s26, %s27
    %p41 = scmp.eq.s32.totalorder %s19, 1
    %p42 = por %p40, %p41
    %p44 = scmp.ne.s32.totalorder %s27, %s43
    %p45 = scmp.eq.s32.totalorder %s19, 0
    %p46 = por %p44, %p45
    %s48 = sadd.s32 %s47, 1
    %p51 = scmp.eq.s32.totalorder %s13, 1
    %p52 = scmp.ne.s32.totalorder %s47, %s49
    %p53 = scmp.eq.s32.totalorder %s13, 0
    %p54 = por %p52, %p53
    %p55 = scmp.ne.s32.totalorder %s47, %s49
    %p56 = scmp.eq.s32.totalorder %s18, 1
    %p57 = por %p55, %p56
    %p58 = scmp.ne.s32.totalorder %s49, %s50
    %p59 = scmp.eq.s32.totalorder %s18, 0
    %p60 = por %p58, %p59
    %p61 = scmp.ne.s32.totalorder %s49, %s50
    %p62 = scmp.eq.s32.totalorder %s19, 1
    %p63 = por %p61, %p62
    %p65 = scmp.ne.s32.totalorder %s50, %s64
    %p66 = scmp.eq.s32.totalorder %s19, 0
    %p67 = por %p65, %p66
    %s69 = sadd.s32 %s68, 1
    %p72 = scmp.eq.s32.totalorder %s13, 1
    %p73 = scmp.ne.s32.totalorder %s68, %s70
    %p74 = scmp.eq.s32.totalorder %s13, 0
    %p75 = por %p73, %p74
    %p76 = scmp.ne.s32.totalorder %s68, %s70
    %p77 = scmp.eq.s32.totalorder %s18, 1
    %p78 = por %p76, %p77
    %p79 = scmp.ne.s32.totalorder %s70, %s71
    %p80 = scmp.eq.s32.totalorder %s18, 0
    %p81 = por %p79, %p80
    %p82 = scmp.ne.s32.totalorder %s70, %s71
    %p83 = scmp.eq.s32.totalorder %s19, 1
    %p84 = por %p82, %p83
    %p86 = scmp.ne.s32.totalorder %s71, %s85
    %p87 = scmp.eq.s32.totalorder %s19, 0
    %p88 = por %p86, %p87
    %s89 = ssub.s32 %s13, %s20
    %p90 = scmp.eq.s32.totalorder %s89, 0
    %s92 = sadd.s32 %s91, 1
    %s93 = scalar_select %p90, %s91, %s92
    %p96 = pneg %p90
    %p97 = scmp.eq.s32.totalorder %s13, 1
    %p98 = por %p96, %p97
    %p99 = scmp.ne.s32.totalorder %s91, %s94
    %p100 = scmp.eq.s32.totalorder %s13, 0
    %p101 = por %p99, %p100
    %p102 = scmp.ne.s32.totalorder %s91, %s94
    %p103 = scmp.eq.s32.totalorder %s18, 1
    %p104 = por %p102, %p103
    %p105 = scmp.ne.s32.totalorder %s94, %s95
    %p106 = scmp.eq.s32.totalorder %s18, 0
    %p107 = por %p105, %p106
    %p108 = scmp.ne.s32.totalorder %s94, %s95
    %p109 = scmp.eq.s32.totalorder %s19, 1
    %p110 = por %p108, %p109
    %p112 = scmp.ne.s32.totalorder %s95, %s111
    %p113 = scmp.eq.s32.totalorder %s19, 0
    %p114 = por %p112, %p113
    %s116 = sadd.s32 %s115, 1
    %p119 = scmp.eq.s32.totalorder %s13, 1
    %p120 = scmp.ne.s32.totalorder %s115, %s117
    %p121 = scmp.eq.s32.totalorder %s13, 0
    %p122 = por %p120, %p121
    %p123 = scmp.ne.s32.totalorder %s115, %s117
    %p124 = scmp.eq.s32.totalorder %s18, 1
    %p125 = por %p123, %p124
    %p126 = scmp.ne.s32.totalorder %s117, %s118
    %p127 = scmp.eq.s32.totalorder %s18, 0
    %p128 = por %p126, %p127
    %p129 = scmp.ne.s32.totalorder %s117, %s118
    %p130 = scmp.eq.s32.totalorder %s19, 1
    %p131 = por %p129, %p130
    %p133 = scmp.ne.s32.totalorder %s118, %s132
    %p134 = scmp.eq.s32.totalorder %s19, 0
    %p135 = por %p133, %p134
    %s137 = sadd.s32 %s136, 1
    %p140 = scmp.eq.s32.totalorder %s13, 1
    %p141 = scmp.ne.s32.totalorder %s136, %s138
    %p142 = scmp.eq.s32.totalorder %s13, 0
    %p143 = por %p141, %p142
    %p144 = scmp.ne.s32.totalorder %s136, %s138
    %p145 = scmp.eq.s32.totalorder %s18, 1
    %p146 = por %p144, %p145
    %p147 = scmp.ne.s32.totalorder %s138, %s139
    %p148 = scmp.eq.s32.totalorder %s18, 0
    %p149 = por %p147, %p148
    %p150 = scmp.ne.s32.totalorder %s138, %s139
    %p151 = scmp.eq.s32.totalorder %s19, 1
    %p152 = por %p150, %p151
    %p154 = scmp.ne.s32.totalorder %s139, %s153
    %p155 = scmp.eq.s32.totalorder %s19, 0
    %p156 = por %p154, %p155
    %s158 = sadd.s32 %s157, 1
    %p161 = scmp.eq.s32.totalorder %s13, 1
    %p162 = scmp.ne.s32.totalorder %s157, %s159
    %p163 = scmp.eq.s32.totalorder %s13, 0
    %p164 = por %p162, %p163
    %p165 = scmp.ne.s32.totalorder %s157, %s159
    %p166 = scmp.eq.s32.totalorder %s18, 1
    %p167 = por %p165, %p166
    %p168 = scmp.ne.s32.totalorder %s159, %s160
    %p169 = scmp.eq.s32.totalorder %s18, 0
    %p170 = por %p168, %p169
    %p171 = scmp.ne.s32.totalorder %s159, %s160
    %p172 = scmp.eq.s32.totalorder %s19, 1
    %p173 = por %p171, %p172
    %p175 = scmp.ne.s32.totalorder %s160, %s174
    %p176 = scmp.eq.s32.totalorder %s19, 0
    %p177 = por %p175, %p176
    %p178 = scmp.le.s32.totalorder 1, %s13
    %p179 = scmp.lt.s32.totalorder %s13, 3
    %p180 = pnand %p178, %p179
    %p181 = pneg %p180
    // Predicated region
    $region9: #{_streaming_step.1} parent=5 // pred_check
      _
    $region10: #{_streaming_step.1} parent=5 // pred_check_branch
      %183 = sbr.rel (%p180) target = $region12
    $region11: #{_streaming_step.1} parent=5 // pred_region
      %s184 = ssub.s32 %s13, 1
      // Predicated region
      $region13: #{_streaming_step.1} parent=11 // pred_check
        %p185 = pneg %p60
      $region14: #{_streaming_step.1} parent=11 // pred_check_branch
        %187 = sbr.rel (%p185) target = $region16
      $region15: #{_streaming_step.1} parent=11 // pred_region
        _
      $region16: #{_streaming_step.1} parent=11 // pred_fallthru
        _
      // Predicated region
      $region17: #{_streaming_step.1} parent=11 // pred_check
        %p188 = pneg %p81
      $region18: #{_streaming_step.1} parent=11 // pred_check_branch
        %190 = sbr.rel (%p188) target = $region20
      $region19: #{_streaming_step.1} parent=11 // pred_region
        _
      $region20: #{_streaming_step.1} parent=11 // pred_fallthru
        _
    $region12: #{_streaming_step.1} parent=5 // pred_fallthru
      _
    %p191 = scmp.lt.s32.totalorder %s13, 2
    // Predicated region
    $region21: #{_streaming_step.1} parent=5 // pred_check
      %p192 = pneg %p191
    $region22: #{_streaming_step.1} parent=5 // pred_check_branch
      %194 = sbr.rel (%p192) target = $region24
    $region23: #{_streaming_step.1} parent=5 // pred_region
      // Predicated region
      $region25: #{_streaming_step.1} parent=23 // pred_check
        %p195 = pneg %p33
      $region26: #{_streaming_step.1} parent=23 // pred_check_branch
        %197 = sbr.rel (%p195) target = $region28
      $region27: #{_streaming_step.1} parent=23 // pred_region
        %s198 = smul.u32 16, %s13
        %p199 = scmp.lt.s32.totalorder %s198, 31
        %s200 = scalar_select %p199, %s198, 31
        %s201 = smul.addr %s200, 4
        %s202 = scalar_lea.vmem %s0, %s201
        %s203 = smul.u32 16, %s13
      $region28: #{_streaming_step.1} parent=23 // pred_fallthru
        _
    $region24: #{_streaming_step.1} parent=5 // pred_fallthru
      _
    %p204 = scmp.le.s32.totalorder 1, %s13
    %p205 = scmp.lt.s32.totalorder %s13, 3
    %p206 = pnand %p204, %p205
    %p207 = pneg %p206
    // Predicated region
    $region29: #{_streaming_step.1} parent=5 // pred_check
      _
    $region30: #{_streaming_step.1} parent=5 // pred_check_branch
      %209 = sbr.rel (%p206) target = $region32
    $region31: #{_streaming_step.1} parent=5 // pred_region
      %s210 = ssub.s32 %s13, 1
      %s211 = smul.u32 16, %s18
      %p212 = scmp.lt.s32.totalorder %s211, 31
      %s213 = scalar_select %p212, %s211, 31
      %s214 = smul.addr %s213, 4
      %s215 = scalar_lea.vmem %s0, %s214
      %p216 = pneg %p39
      %p217 = pneg %p36
      %p218 = pneg %p60
      %p219 = pneg %p57
      %p220 = pneg %p81
      %p221 = pneg %p78
      %p222 = pneg %p107
      %p223 = pneg %p104
      %s224 = smul.u32 16, %s18
      %p225 = scmp.lt.s32.totalorder %s224, 31
      %s226 = scalar_select %p225, %s224, 31
      %s227 = smul.addr %s226, 8
      %s228 = scalar_lea.vmem %s3, %s227
      %p229 = pneg %p128
      %p230 = pneg %p125
      %p231 = pneg %p149
      %p232 = pneg %p146
      %p233 = pneg %p170
      %p234 = pneg %p167
      %s235 = smul.u32 16, %s18
      %p236 = scmp.lt.s32.totalorder %s235, 31
      %s237 = scalar_select %p236, %s235, 31
      %s238 = smul.addr %s237, 4
      %s239 = scalar_lea.vmem %s0, %s238
      %s240 = smul.u32 16, %s18
      %s241 = smul.u32 16, %s18
      %p242 = scmp.lt.s32.totalorder %s241, 31
      %s243 = scalar_select %p242, %s241, 31
      %s244 = smul.addr %s243, 8
      %s245 = scalar_lea.vmem %s3, %s244
      %s246 = smul.u32 16, %s18
      %v248 = vld [vmem:[%s2] sm:$0xf]
      %v249 = vld [vmem:[%s2 + $0x4] sm:$0xf]
      %v250 = vld [vmem:[%s2 + $0x8] sm:$0xf]
      %v251 = vld [vmem:[%s2 + $0xc] sm:$0xf]
      %v252 = vld [vmem:[%s2 + $0x10] sm:$0xf]
      %v253 = vld [vmem:[%s2 + $0x14] sm:$0xf]
      %v254 = vld [vmem:[%s2 + $0x18] sm:$0xf]
      %v255 = vld [vmem:[%s2 + $0x1c] sm:$0xf]
      %v256 = vld [vmem:[%s2 + $0x20] sm:$0xf]
      %v257 = vld [vmem:[%s2 + $0x24] sm:$0xf]
      %v258 = vld [vmem:[%s2 + $0x28] sm:$0xf]
      %v259 = vld [vmem:[%s2 + $0x2c] sm:$0xf]
      %v260 = vld [vmem:[%s2 + $0x30] sm:$0xf]
      %v261 = vld [vmem:[%s2 + $0x34] sm:$0xf]
      %v262 = vld [vmem:[%s2 + $0x38] sm:$0xf]
      %v263 = vld [vmem:[%s2 + $0x3c] sm:$0xf]
      %v264 = vld [vmem:[%s2 + $0x40] sm:$0xf]
      %v265 = vld [vmem:[%s2 + $0x44] sm:$0xf]
      %v266 = vld [vmem:[%s2 + $0x48] sm:$0xf]
      %v267 = vld [vmem:[%s2 + $0x4c] sm:$0xf]
      %v268 = vld [vmem:[%s2 + $0x50] sm:$0xf]
      %v269 = vld [vmem:[%s2 + $0x54] sm:$0xf]
      %v270 = vld [vmem:[%s2 + $0x58] sm:$0xf]
      %v271 = vld [vmem:[%s2 + $0x5c] sm:$0xf]
      %v272 = vld [vmem:[%s2 + $0x60] sm:$0xf]
      %v273 = vld [vmem:[%s2 + $0x64] sm:$0xf]
      %v274 = vld [vmem:[%s2 + $0x68] sm:$0xf]
      %v275 = vld [vmem:[%s2 + $0x6c] sm:$0xf]
      %v276 = vld [vmem:[%s2 + $0x70] sm:$0xf]
      %v277 = vld [vmem:[%s2 + $0x74] sm:$0xf]
      %v278 = vld [vmem:[%s2 + $0x78] sm:$0xf]
      %v279 = vld [vmem:[%s2 + $0x7c] sm:$0xf]
      %v280 = vld [vmem:[%s2 + $0x80] sm:$0xf]
      %v281 = vld [vmem:[%s2 + $0x84] sm:$0xf]
      %v282 = vld [vmem:[%s2 + $0x88] sm:$0xf]
      %v283 = vld [vmem:[%s2 + $0x8c] sm:$0xf]
      %v284 = vld [vmem:[%s2 + $0x90] sm:$0xf]
      %v285 = vld [vmem:[%s2 + $0x94] sm:$0xf]
      %v286 = vld [vmem:[%s2 + $0x98] sm:$0xf]
      %v287 = vld [vmem:[%s2 + $0x9c] sm:$0xf]
      %v288 = vld [vmem:[%s2 + $0xa0] sm:$0xf]
      %v289 = vld [vmem:[%s2 + $0xa4] sm:$0xf]
      %v290 = vld [vmem:[%s2 + $0xa8] sm:$0xf]
      %v291 = vld [vmem:[%s2 + $0xac] sm:$0xf]
      %v292 = vld [vmem:[%s2 + $0xb0] sm:$0xf]
      %v293 = vld [vmem:[%s2 + $0xb4] sm:$0xf]
      %v294 = vld [vmem:[%s2 + $0xb8] sm:$0xf]
      %v295 = vld [vmem:[%s2 + $0xbc] sm:$0xf]
      %v296 = vld [vmem:[%s2 + $0xc0] sm:$0xf]
      %v297 = vunpack.c.l.bf16 %v296
      %v298 = vld [vmem:[%s239] sm:$0xf]
      %v299 = vld [vmem:[%s239 + $0x4] sm:$0xf]
      %v300 = vld [vmem:[%s239 + $0x8] sm:$0xf]
      %v301 = vld [vmem:[%s239 + $0xc] sm:$0xf]
      %v302 = vld [vmem:[%s239 + $0x10] sm:$0xf]
      %v303 = vld [vmem:[%s239 + $0x14] sm:$0xf]
      %v304 = vld [vmem:[%s239 + $0x18] sm:$0xf]
      %v305 = vld [vmem:[%s239 + $0x1c] sm:$0xf]
      %v306 = vld [vmem:[%s239 + $0x20] sm:$0xf]
      %v307 = vld [vmem:[%s239 + $0x24] sm:$0xf]
      %v308 = vld [vmem:[%s239 + $0x28] sm:$0xf]
      %v309 = vld [vmem:[%s239 + $0x2c] sm:$0xf]
      %v310 = vld [vmem:[%s239 + $0x30] sm:$0xf]
      %v311 = vld [vmem:[%s239 + $0x34] sm:$0xf]
      %v312 = vld [vmem:[%s239 + $0x38] sm:$0xf]
      %v313 = vld [vmem:[%s239 + $0x3c] sm:$0xf]
      %v314 = vld [vmem:[%s1] sm:$0x1]
      %v315 = vpack.c.bf16 %v314, %v314
      %v332 = vunpack.c.l.b16 %v264
      %v333 = vunpack.c.l.b16 %v265
      %v334 = vunpack.c.l.b16 %v266
      %v335 = vunpack.c.l.b16 %v267
      %v336 = vunpack.c.l.b16 %v268
      %v337 = vunpack.c.l.b16 %v269
      %v338 = vunpack.c.l.b16 %v270
      %v339 = vunpack.c.l.b16 %v271
      %v340 = vunpack.c.l.b16 %v272
      %v341 = vunpack.c.l.b16 %v273
      %v342 = vunpack.c.l.b16 %v274
      %v343 = vunpack.c.l.b16 %v275
      %v344 = vunpack.c.l.b16 %v276
      %v345 = vunpack.c.l.b16 %v277
      %v346 = vunpack.c.l.b16 %v278
      %v347 = vunpack.c.l.b16 %v279
      %v348 = vpack.c.b16 %v333, %v332
      %v349 = vpack.c.b16 %v335, %v334
      %v350 = vpack.c.b16 %v337, %v336
      %v351 = vpack.c.b16 %v339, %v338
      %v352 = vpack.c.b16 %v341, %v340
      %v353 = vpack.c.b16 %v343, %v342
      %v354 = vpack.c.b16 %v345, %v344
      %v355 = vpack.c.b16 %v347, %v346
      %364 = vmatprep.subr.bf16.mxu0 0
      %365 = vmatpush1.bf16.msra.mxu0 %v355
      %366 = vmatprep.subr.bf16.mxu0 0
      %367 = vmatpush1.bf16.msra.mxu0 %v354
      %368 = vmatprep.subr.bf16.mxu0 0
      %369 = vmatpush1.bf16.msra.mxu0 %v353
      %370 = vmatprep.subr.bf16.mxu0 0
      %371 = vmatpush1.bf16.msra.mxu0 %v352
      %372 = vmatprep.subr.bf16.mxu0 0
      %373 = vmatpush1.bf16.msra.mxu0 %v351
      %374 = vmatprep.subr.bf16.mxu0 0
      %375 = vmatpush1.bf16.msra.mxu0 %v350
      %376 = vmatprep.subr.bf16.mxu0 0
      %377 = vmatpush1.bf16.msra.mxu0 %v349
      %378 = vmatprep.subr.bf16.mxu0 0
      %379 = vmatpush1.bf16.msra.mxu0 %v348
      %380 = vmatprep.subr.bf16.mxu0 0
      %381 = vmatpush2.bf16.msra.mxu0 0
      %382 = vmatprep.subr.bf16.mxu0 0
      %383 = vmatpush2.bf16.msra.mxu0 0
      %384 = vmatprep.subr.bf16.mxu0 0
      %385 = vmatpush2.bf16.msra.mxu0 0
      %386 = vmatprep.subr.bf16.mxu0 0
      %387 = vmatpush2.bf16.msra.mxu0 0
      %388 = vmatprep.subr.bf16.mxu0 0
      %389 = vmatpush2.bf16.msra.mxu0 0
      %390 = vmatprep.subr.bf16.mxu0 0
      %391 = vmatpush2.bf16.msra.mxu0 0
      %392 = vmatprep.subr.bf16.mxu0 0
      %393 = vmatpush2.bf16.msra.mxu0 0
      %394 = vmatprep.subr.bf16.mxu0 0
      %395 = vmatpush2.bf16.msra.mxu0 0
      %396 = vmatprep.mubr.bf16.mxu0 0
      %397 = vmatmul.mubr.bf16.gmra.mxu0 %v315
      %v398 = vpop.f32.mrf.mxu0
      %v399 = vadd.f32 0.0, %v398
      %v400 = vpop.f32.mrf.mxu0
      %v401 = vpop.f32.mrf.mxu0
      %v402 = vpop.f32.mrf.mxu0
      %403 = vdwg.mxu0
      %v404 = vlaneseq
      %v405 = vshrl.u32 %v404, 7
      %v406 = vsub.s32 0, %v405
      %v407 = vrot.slane %v399, %v406
      %v424 = vunpack.c.l.b16 %v298
      %v425 = vunpack.c.l.b16 %v299
      %v426 = vunpack.c.l.b16 %v300
      %v427 = vunpack.c.l.b16 %v301
      %v428 = vunpack.c.l.b16 %v302
      %v429 = vunpack.c.l.b16 %v303
      %v430 = vunpack.c.l.b16 %v304
      %v431 = vunpack.c.l.b16 %v305
      %v432 = vunpack.c.l.b16 %v306
      %v433 = vunpack.c.l.b16 %v307
      %v434 = vunpack.c.l.b16 %v308
      %v435 = vunpack.c.l.b16 %v309
      %v436 = vunpack.c.l.b16 %v310
      %v437 = vunpack.c.l.b16 %v311
      %v438 = vunpack.c.l.b16 %v312
      %v439 = vunpack.c.l.b16 %v313
      %v440 = vpack.c.b16 %v425, %v424
      %v441 = vpack.c.b16 %v427, %v426
      %v442 = vpack.c.b16 %v429, %v428
      %v443 = vpack.c.b16 %v431, %v430
      %v444 = vpack.c.b16 %v433, %v432
      %v445 = vpack.c.b16 %v435, %v434
      %v446 = vpack.c.b16 %v437, %v436
      %v447 = vpack.c.b16 %v439, %v438
      %v472 = vunpack.c.l.b16 %v248
      %v473 = vunpack.c.l.b16 %v249
      %v474 = vunpack.c.l.b16 %v250
      %v475 = vunpack.c.l.b16 %v251
      %v476 = vunpack.c.l.b16 %v252
      %v477 = vunpack.c.l.b16 %v253
      %v478 = vunpack.c.l.b16 %v254
      %v479 = vunpack.c.l.b16 %v255
      %v480 = vunpack.c.l.b16 %v256
      %v481 = vunpack.c.l.b16 %v257
      %v482 = vunpack.c.l.b16 %v258
      %v483 = vunpack.c.l.b16 %v259
      %v484 = vunpack.c.l.b16 %v260
      %v485 = vunpack.c.l.b16 %v261
      %v486 = vunpack.c.l.b16 %v262
      %v487 = vunpack.c.l.b16 %v263
      %v488 = vpack.c.b16 %v473, %v472
      %v489 = vpack.c.b16 %v475, %v474
      %v490 = vpack.c.b16 %v477, %v476
      %v491 = vpack.c.b16 %v479, %v478
      %v492 = vpack.c.b16 %v481, %v480
      %v493 = vpack.c.b16 %v483, %v482
      %v494 = vpack.c.b16 %v485, %v484
      %v495 = vpack.c.b16 %v487, %v486
      %504 = vmatprep.subr.bf16.mxu0 0
      %505 = vmatpush1.bf16.msra.mxu0 %v495
      %506 = vmatprep.subr.bf16.mxu0 0
      %507 = vmatpush1.bf16.msra.mxu0 %v494
      %508 = vmatprep.subr.bf16.mxu0 0
      %509 = vmatpush1.bf16.msra.mxu0 %v493
      %510 = vmatprep.subr.bf16.mxu0 0
      %511 = vmatpush1.bf16.msra.mxu0 %v492
      %512 = vmatprep.subr.bf16.mxu0 0
      %513 = vmatpush1.bf16.msra.mxu0 %v491
      %514 = vmatprep.subr.bf16.mxu0 0
      %515 = vmatpush1.bf16.msra.mxu0 %v490
      %516 = vmatprep.subr.bf16.mxu0 0
      %517 = vmatpush1.bf16.msra.mxu0 %v489
      %518 = vmatprep.subr.bf16.mxu0 0
      %519 = vmatpush1.bf16.msra.mxu0 %v488
      %520 = vmatprep.subr.bf16.mxu0 0
      %521 = vmatpush2.bf16.msra.mxu0 0
      %522 = vmatprep.subr.bf16.mxu0 0
      %523 = vmatpush2.bf16.msra.mxu0 0
      %524 = vmatprep.subr.bf16.mxu0 0
      %525 = vmatpush2.bf16.msra.mxu0 0
      %526 = vmatprep.subr.bf16.mxu0 0
      %527 = vmatpush2.bf16.msra.mxu0 0
      %528 = vmatprep.subr.bf16.mxu0 0
      %529 = vmatpush2.bf16.msra.mxu0 0
      %530 = vmatprep.subr.bf16.mxu0 0
      %531 = vmatpush2.bf16.msra.mxu0 0
      %532 = vmatprep.subr.bf16.mxu0 0
      %533 = vmatpush2.bf16.msra.mxu0 0
      %534 = vmatprep.subr.bf16.mxu0 0
      %535 = vmatpush2.bf16.msra.mxu0 0
      %536 = vmatprep.mubr.bf16.mxu0 0
      %537 = vmatmul.mubr.bf16.gmra.mxu0 %v440
      %v538 = vpop.f32.mrf.mxu0
      %v539 = vadd.f32 %v407, %v538
      %v540 = vpop.f32.mrf.mxu0
      %v541 = vpop.f32.mrf.mxu0
      %v542 = vadd.f32 %v407, %v541
      %v543 = vpop.f32.mrf.mxu0
      %544 = vmatprep.mubr.bf16.mxu0 0
      %545 = vmatmul.mubr.bf16.gmra.mxu0 %v441
      %v546 = vpop.f32.mrf.mxu0
      %v547 = vadd.f32 %v407, %v546
      %v548 = vpop.f32.mrf.mxu0
      %v549 = vpop.f32.mrf.mxu0
      %v550 = vadd.f32 %v407, %v549
      %v551 = vpop.f32.mrf.mxu0
      %552 = vmatprep.mubr.bf16.mxu0 0
      %553 = vmatmul.mubr.bf16.gmra.mxu0 %v442
      %v554 = vpop.f32.mrf.mxu0
      %v555 = vadd.f32 %v407, %v554
      %v556 = vpop.f32.mrf.mxu0
      %v557 = vpop.f32.mrf.mxu0
      %v558 = vadd.f32 %v407, %v557
      %v559 = vpop.f32.mrf.mxu0
      %560 = vmatprep.mubr.bf16.mxu0 0
      %561 = vmatmul.mubr.bf16.gmra.mxu0 %v443
      %v562 = vpop.f32.mrf.mxu0
      %v563 = vadd.f32 %v407, %v562
      %v564 = vpop.f32.mrf.mxu0
      %v565 = vpop.f32.mrf.mxu0
      %v566 = vadd.f32 %v407, %v565
      %v567 = vpop.f32.mrf.mxu0
      %568 = vmatprep.mubr.bf16.mxu0 0
      %569 = vmatmul.mubr.bf16.gmra.mxu0 %v444
      %v570 = vpop.f32.mrf.mxu0
      %v571 = vadd.f32 %v407, %v570
      %v572 = vpop.f32.mrf.mxu0
      %v573 = vpop.f32.mrf.mxu0
      %v574 = vadd.f32 %v407, %v573
      %v575 = vpop.f32.mrf.mxu0
      %576 = vmatprep.mubr.bf16.mxu0 0
      %577 = vmatmul.mubr.bf16.gmra.mxu0 %v445
      %v578 = vpop.f32.mrf.mxu0
      %v579 = vadd.f32 %v407, %v578
      %v580 = vpop.f32.mrf.mxu0
      %v581 = vpop.f32.mrf.mxu0
      %v582 = vadd.f32 %v407, %v581
      %v583 = vpop.f32.mrf.mxu0
      %584 = vmatprep.mubr.bf16.mxu0 0
      %585 = vmatmul.mubr.bf16.gmra.mxu0 %v446
      %v586 = vpop.f32.mrf.mxu0
      %v587 = vadd.f32 %v407, %v586
      %v588 = vpop.f32.mrf.mxu0
      %v589 = vpop.f32.mrf.mxu0
      %v590 = vadd.f32 %v407, %v589
      %v591 = vpop.f32.mrf.mxu0
      %592 = vmatprep.mubr.bf16.mxu0 0
      %593 = vmatmul.mubr.bf16.gmra.mxu0 %v447
      %v594 = vpop.f32.mrf.mxu0
      %v595 = vadd.f32 %v407, %v594
      %v596 = vpop.f32.mrf.mxu0
      %v597 = vpop.f32.mrf.mxu0
      %v598 = vadd.f32 %v407, %v597
      %v599 = vpop.f32.mrf.mxu0
      %600 = vdwg.mxu0
      %v601 = vlaneseq
      %v602 = vshrl.u32 %v601, 7
      %v603 = vsub.s32 0, %v602
      %v604 = vrot.slane %v297, %v603
      %v605 = vadd.f32 %v539, %v604
      %v606 = vadd.f32 %v542, %v604
      %v607 = vadd.f32 %v547, %v604
      %v608 = vadd.f32 %v550, %v604
      %v609 = vadd.f32 %v555, %v604
      %v610 = vadd.f32 %v558, %v604
      %v611 = vadd.f32 %v563, %v604
      %v612 = vadd.f32 %v566, %v604
      %v613 = vadd.f32 %v571, %v604
      %v614 = vadd.f32 %v574, %v604
      %v615 = vadd.f32 %v579, %v604
      %v616 = vadd.f32 %v582, %v604
      %v617 = vadd.f32 %v587, %v604
      %v618 = vadd.f32 %v590, %v604
      %v619 = vadd.f32 %v595, %v604
      %v620 = vadd.f32 %v598, %v604
      %v621 = vtanh.pop %v605
      %v622 = vtanh.pop %v606
      %v623 = vtanh.pop %v607
      %v624 = vtanh.pop %v608
      %v625 = vtanh.pop %v609
      %v626 = vtanh.pop %v610
      %v627 = vtanh.pop %v611
      %v628 = vtanh.pop %v612
      %v629 = vtanh.pop %v613
      %v630 = vtanh.pop %v614
      %v631 = vtanh.pop %v615
      %v632 = vtanh.pop %v616
      %v633 = vtanh.pop %v617
      %v634 = vtanh.pop %v618
      %v635 = vtanh.pop %v619
      %v636 = vtanh.pop %v620
      %v637 = vpack.c.bf16 %v622, %v621
      %v638 = vpack.c.bf16 %v624, %v623
      %v639 = vpack.c.bf16 %v626, %v625
      %v640 = vpack.c.bf16 %v628, %v627
      %v641 = vpack.c.bf16 %v630, %v629
      %v642 = vpack.c.bf16 %v632, %v631
      %v643 = vpack.c.bf16 %v634, %v633
      %v644 = vpack.c.bf16 %v636, %v635
      %v661 = vunpack.c.l.b16 %v280
      %v662 = vunpack.c.l.b16 %v281
      %v663 = vunpack.c.l.b16 %v282
      %v664 = vunpack.c.l.b16 %v283
      %v665 = vunpack.c.l.b16 %v284
      %v666 = vunpack.c.l.b16 %v285
      %v667 = vunpack.c.l.b16 %v286
      %v668 = vunpack.c.l.b16 %v287
      %v669 = vunpack.c.l.b16 %v288
      %v670 = vunpack.c.l.b16 %v289
      %v671 = vunpack.c.l.b16 %v290
      %v672 = vunpack.c.l.b16 %v291
      %v673 = vunpack.c.l.b16 %v292
      %v674 = vunpack.c.l.b16 %v293
      %v675 = vunpack.c.l.b16 %v294
      %v676 = vunpack.c.l.b16 %v295
      %v677 = vpack.c.b16 %v662, %v661
      %v678 = vpack.c.b16 %v664, %v663
      %v679 = vpack.c.b16 %v666, %v665
      %v680 = vpack.c.b16 %v668, %v667
      %v681 = vpack.c.b16 %v670, %v669
      %v682 = vpack.c.b16 %v672, %v671
      %v683 = vpack.c.b16 %v674, %v673
      %v684 = vpack.c.b16 %v676, %v675
      %693 = vmatprep.subr.bf16.mxu0 0
      %694 = vmatpush1.bf16.msra.mxu0 %v684
      %695 = vmatprep.subr.bf16.mxu0 0
      %696 = vmatpush1.bf16.msra.mxu0 %v683
      %697 = vmatprep.subr.bf16.mxu0 0
      %698 = vmatpush1.bf16.msra.mxu0 %v682
      %699 = vmatprep.subr.bf16.mxu0 0
      %700 = vmatpush1.bf16.msra.mxu0 %v681
      %701 = vmatprep.subr.bf16.mxu0 0
      %702 = vmatpush1.bf16.msra.mxu0 %v680
      %703 = vmatprep.subr.bf16.mxu0 0
      %704 = vmatpush1.bf16.msra.mxu0 %v679
      %705 = vmatprep.subr.bf16.mxu0 0
      %706 = vmatpush1.bf16.msra.mxu0 %v678
      %707 = vmatprep.subr.bf16.mxu0 0
      %708 = vmatpush1.bf16.msra.mxu0 %v677
      %709 = vmatprep.subr.bf16.mxu0 0
      %710 = vmatpush2.bf16.msra.mxu0 0
      %711 = vmatprep.subr.bf16.mxu0 0
      %712 = vmatpush2.bf16.msra.mxu0 0
      %713 = vmatprep.subr.bf16.mxu0 0
      %714 = vmatpush2.bf16.msra.mxu0 0
      %715 = vmatprep.subr.bf16.mxu0 0
      %716 = vmatpush2.bf16.msra.mxu0 0
      %717 = vmatprep.subr.bf16.mxu0 0
      %718 = vmatpush2.bf16.msra.mxu0 0
      %719 = vmatprep.subr.bf16.mxu0 0
      %720 = vmatpush2.bf16.msra.mxu0 0
      %721 = vmatprep.subr.bf16.mxu0 0
      %722 = vmatpush2.bf16.msra.mxu0 0
      %723 = vmatprep.subr.bf16.mxu0 0
      %724 = vmatpush2.bf16.msra.mxu0 0
      %725 = vmatprep.mubr.bf16.mxu0 0
      %726 = vmatmul.mubr.bf16.gmra.mxu0 %v637
      %v727 = vpop.f32.mrf.mxu0
      %v728 = vadd.f32 0.0, %v727
      %v729 = vpop.f32.mrf.mxu0
      %v730 = vpop.f32.mrf.mxu0
      %v731 = vadd.f32 0.0, %v730
      %v732 = vpop.f32.mrf.mxu0
      %733 = vmatprep.mubr.bf16.mxu0 0
      %734 = vmatmul.mubr.bf16.gmra.mxu0 %v638
      %v735 = vpop.f32.mrf.mxu0
      %v736 = vadd.f32 0.0, %v735
      %v737 = vpop.f32.mrf.mxu0
      %v738 = vpop.f32.mrf.mxu0
      %v739 = vadd.f32 0.0, %v738
      %v740 = vpop.f32.mrf.mxu0
      %741 = vmatprep.mubr.bf16.mxu0 0
      %742 = vmatmul.mubr.bf16.gmra.mxu0 %v639
      %v743 = vpop.f32.mrf.mxu0
      %v744 = vadd.f32 0.0, %v743
      %v745 = vpop.f32.mrf.mxu0
      %v746 = vpop.f32.mrf.mxu0
      %v747 = vadd.f32 0.0, %v746
      %v748 = vpop.f32.mrf.mxu0
      %749 = vmatprep.mubr.bf16.mxu0 0
      %750 = vmatmul.mubr.bf16.gmra.mxu0 %v640
      %v751 = vpop.f32.mrf.mxu0
      %v752 = vadd.f32 0.0, %v751
      %v753 = vpop.f32.mrf.mxu0
      %v754 = vpop.f32.mrf.mxu0
      %v755 = vadd.f32 0.0, %v754
      %v756 = vpop.f32.mrf.mxu0
      %757 = vmatprep.mubr.bf16.mxu0 0
      %758 = vmatmul.mubr.bf16.gmra.mxu0 %v641
      %v759 = vpop.f32.mrf.mxu0
      %v760 = vadd.f32 0.0, %v759
      %v761 = vpop.f32.mrf.mxu0
      %v762 = vpop.f32.mrf.mxu0
      %v763 = vadd.f32 0.0, %v762
      %v764 = vpop.f32.mrf.mxu0
      %765 = vmatprep.mubr.bf16.mxu0 0
      %766 = vmatmul.mubr.bf16.gmra.mxu0 %v642
      %v767 = vpop.f32.mrf.mxu0
      %v768 = vadd.f32 0.0, %v767
      %v769 = vpop.f32.mrf.mxu0
      %v770 = vpop.f32.mrf.mxu0
      %v771 = vadd.f32 0.0, %v770
      %v772 = vpop.f32.mrf.mxu0
      %773 = vmatprep.mubr.bf16.mxu0 0
      %774 = vmatmul.mubr.bf16.gmra.mxu0 %v643
      %v775 = vpop.f32.mrf.mxu0
      %v776 = vadd.f32 0.0, %v775
      %v777 = vpop.f32.mrf.mxu0
      %v778 = vpop.f32.mrf.mxu0
      %v779 = vadd.f32 0.0, %v778
      %v780 = vpop.f32.mrf.mxu0
      %781 = vmatprep.mubr.bf16.mxu0 0
      %782 = vmatmul.mubr.bf16.gmra.mxu0 %v644
      %v783 = vpop.f32.mrf.mxu0
      %v784 = vadd.f32 0.0, %v783
      %v785 = vpop.f32.mrf.mxu0
      %v786 = vpop.f32.mrf.mxu0
      %v787 = vadd.f32 0.0, %v786
      %v788 = vpop.f32.mrf.mxu0
      %789 = vdwg.mxu0
      %790 = vmax.xlane.f32.xlu0 %v728
      %v791 = vpop.xlane.xlu0 %790
      %792 = vmax.xlane.f32.xlu0 %v731
      %v793 = vpop.xlane.xlu0 %792
      %794 = vmax.xlane.f32.xlu0 %v736
      %v795 = vpop.xlane.xlu0 %794
      %796 = vmax.xlane.f32.xlu0 %v739
      %v797 = vpop.xlane.xlu0 %796
      %798 = vmax.xlane.f32.xlu0 %v744
      %v799 = vpop.xlane.xlu0 %798
      %800 = vmax.xlane.f32.xlu0 %v747
      %v801 = vpop.xlane.xlu0 %800
      %802 = vmax.xlane.f32.xlu0 %v752
      %v803 = vpop.xlane.xlu0 %802
      %804 = vmax.xlane.f32.xlu0 %v755
      %v805 = vpop.xlane.xlu0 %804
      %806 = vmax.xlane.f32.xlu0 %v760
      %v807 = vpop.xlane.xlu0 %806
      %808 = vmax.xlane.f32.xlu0 %v763
      %v809 = vpop.xlane.xlu0 %808
      %810 = vmax.xlane.f32.xlu0 %v768
      %v811 = vpop.xlane.xlu0 %810
      %812 = vmax.xlane.f32.xlu0 %v771
      %v813 = vpop.xlane.xlu0 %812
      %814 = vmax.xlane.f32.xlu0 %v776
      %v815 = vpop.xlane.xlu0 %814
      %816 = vmax.xlane.f32.xlu0 %v779
      %v817 = vpop.xlane.xlu0 %816
      %818 = vmax.xlane.f32.xlu0 %v784
      %v819 = vpop.xlane.xlu0 %818
      %820 = vmax.xlane.f32.xlu0 %v787
      %v821 = vpop.xlane.xlu0 %820
      %v822 = vlaneseq
      %v823 = vand.u32 %v822, 127
      %vm824 = vcmp.eq.f32.partialorder %v728, %v791
      %vm825 = vcmp.eq.f32.partialorder %v731, %v793
      %vm826 = vcmp.eq.f32.partialorder %v736, %v795
      %vm827 = vcmp.eq.f32.partialorder %v739, %v797
      %vm828 = vcmp.eq.f32.partialorder %v744, %v799
      %vm829 = vcmp.eq.f32.partialorder %v747, %v801
      %vm830 = vcmp.eq.f32.partialorder %v752, %v803
      %vm831 = vcmp.eq.f32.partialorder %v755, %v805
      %vm832 = vcmp.eq.f32.partialorder %v760, %v807
      %vm833 = vcmp.eq.f32.partialorder %v763, %v809
      %vm834 = vcmp.eq.f32.partialorder %v768, %v811
      %vm835 = vcmp.eq.f32.partialorder %v771, %v813
      %vm836 = vcmp.eq.f32.partialorder %v776, %v815
      %vm837 = vcmp.eq.f32.partialorder %v779, %v817
      %vm838 = vcmp.eq.f32.partialorder %v784, %v819
      %vm839 = vcmp.eq.f32.partialorder %v787, %v821
      %v840 = vsel %vm824, %v823, 128
      %v841 = vsel %vm825, %v823, 128
      %v842 = vsel %vm826, %v823, 128
      %v843 = vsel %vm827, %v823, 128
      %v844 = vsel %vm828, %v823, 128
      %v845 = vsel %vm829, %v823, 128
      %v846 = vsel %vm830, %v823, 128
      %v847 = vsel %vm831, %v823, 128
      %v848 = vsel %vm832, %v823, 128
      %v849 = vsel %vm833, %v823, 128
      %v850 = vsel %vm834, %v823, 128
      %v851 = vsel %vm835, %v823, 128
      %v852 = vsel %vm836, %v823, 128
      %v853 = vsel %vm837, %v823, 128
      %v854 = vsel %vm838, %v823, 128
      %v855 = vsel %vm839, %v823, 128
      %v856 = vand.u32 %v840, 65535
      %v857 = vshra.s32 %v840, 16
      %v858 = vcvt.s32.f32 %v856
      %v859 = vcvt.s32.f32 %v857
      %860 = vmin.xlane.f32.xlu0 %v859
      %v861 = vpop.xlane.xlu0 %860
      %vm862 = vcmp.eq.f32.partialorder %v859, %v861
      %v863 = vsel %vm862, %v858, inf
      %864 = vmin.xlane.f32.xlu0 %v863
      %v865 = vpop.xlane.xlu0 %864
      %v866 = vcvt.f32.s32 %v865
      %v867 = vcvt.f32.s32 %v861
      %v868 = vshll.u32 %v867, 16
      %v869 = vadd.s32 %v868, %v866
      %v870 = vand.u32 %v841, 65535
      %v871 = vshra.s32 %v841, 16
      %v872 = vcvt.s32.f32 %v870
      %v873 = vcvt.s32.f32 %v871
      %874 = vmin.xlane.f32.xlu0 %v873
      %v875 = vpop.xlane.xlu0 %874
      %vm876 = vcmp.eq.f32.partialorder %v873, %v875
      %v877 = vsel %vm876, %v872, inf
      %878 = vmin.xlane.f32.xlu0 %v877
      %v879 = vpop.xlane.xlu0 %878
      %v880 = vcvt.f32.s32 %v879
      %v881 = vcvt.f32.s32 %v875
      %v882 = vshll.u32 %v881, 16
      %v883 = vadd.s32 %v882, %v880
      %v884 = vand.u32 %v842, 65535
      %v885 = vshra.s32 %v842, 16
      %v886 = vcvt.s32.f32 %v884
      %v887 = vcvt.s32.f32 %v885
      %888 = vmin.xlane.f32.xlu0 %v887
      %v889 = vpop.xlane.xlu0 %888
      %vm890 = vcmp.eq.f32.partialorder %v887, %v889
      %v891 = vsel %vm890, %v886, inf
      %892 = vmin.xlane.f32.xlu0 %v891
      %v893 = vpop.xlane.xlu0 %892
      %v894 = vcvt.f32.s32 %v893
      %v895 = vcvt.f32.s32 %v889
      %v896 = vshll.u32 %v895, 16
      %v897 = vadd.s32 %v896, %v894
      %v898 = vand.u32 %v843, 65535
      %v899 = vshra.s32 %v843, 16
      %v900 = vcvt.s32.f32 %v898
      %v901 = vcvt.s32.f32 %v899
      %902 = vmin.xlane.f32.xlu0 %v901
      %v903 = vpop.xlane.xlu0 %902
      %vm904 = vcmp.eq.f32.partialorder %v901, %v903
      %v905 = vsel %vm904, %v900, inf
      %906 = vmin.xlane.f32.xlu0 %v905
      %v907 = vpop.xlane.xlu0 %906
      %v908 = vcvt.f32.s32 %v907
      %v909 = vcvt.f32.s32 %v903
      %v910 = vshll.u32 %v909, 16
      %v911 = vadd.s32 %v910, %v908
      %v912 = vand.u32 %v844, 65535
      %v913 = vshra.s32 %v844, 16
      %v914 = vcvt.s32.f32 %v912
      %v915 = vcvt.s32.f32 %v913
      %916 = vmin.xlane.f32.xlu0 %v915
      %v917 = vpop.xlane.xlu0 %916
      %vm918 = vcmp.eq.f32.partialorder %v915, %v917
      %v919 = vsel %vm918, %v914, inf
      %920 = vmin.xlane.f32.xlu0 %v919
      %v921 = vpop.xlane.xlu0 %920
      %v922 = vcvt.f32.s32 %v921
      %v923 = vcvt.f32.s32 %v917
      %v924 = vshll.u32 %v923, 16
      %v925 = vadd.s32 %v924, %v922
      %v926 = vand.u32 %v845, 65535
      %v927 = vshra.s32 %v845, 16
      %v928 = vcvt.s32.f32 %v926
      %v929 = vcvt.s32.f32 %v927
      %930 = vmin.xlane.f32.xlu0 %v929
      %v931 = vpop.xlane.xlu0 %930
      %vm932 = vcmp.eq.f32.partialorder %v929, %v931
      %v933 = vsel %vm932, %v928, inf
      %934 = vmin.xlane.f32.xlu0 %v933
      %v935 = vpop.xlane.xlu0 %934
      %v936 = vcvt.f32.s32 %v935
      %v937 = vcvt.f32.s32 %v931
      %v938 = vshll.u32 %v937, 16
      %v939 = vadd.s32 %v938, %v936
      %v940 = vand.u32 %v846, 65535
      %v941 = vshra.s32 %v846, 16
      %v942 = vcvt.s32.f32 %v940
      %v943 = vcvt.s32.f32 %v941
      %944 = vmin.xlane.f32.xlu0 %v943
      %v945 = vpop.xlane.xlu0 %944
      %vm946 = vcmp.eq.f32.partialorder %v943, %v945
      %v947 = vsel %vm946, %v942, inf
      %948 = vmin.xlane.f32.xlu0 %v947
      %v949 = vpop.xlane.xlu0 %948
      %v950 = vcvt.f32.s32 %v949
      %v951 = vcvt.f32.s32 %v945
      %v952 = vshll.u32 %v951, 16
      %v953 = vadd.s32 %v952, %v950
      %v954 = vand.u32 %v847, 65535
      %v955 = vshra.s32 %v847, 16
      %v956 = vcvt.s32.f32 %v954
      %v957 = vcvt.s32.f32 %v955
      %958 = vmin.xlane.f32.xlu0 %v957
      %v959 = vpop.xlane.xlu0 %958
      %vm960 = vcmp.eq.f32.partialorder %v957, %v959
      %v961 = vsel %vm960, %v956, inf
      %962 = vmin.xlane.f32.xlu0 %v961
      %v963 = vpop.xlane.xlu0 %962
      %v964 = vcvt.f32.s32 %v963
      %v965 = vcvt.f32.s32 %v959
      %v966 = vshll.u32 %v965, 16
      %v967 = vadd.s32 %v966, %v964
      %v968 = vand.u32 %v848, 65535
      %v969 = vshra.s32 %v848, 16
      %v970 = vcvt.s32.f32 %v968
      %v971 = vcvt.s32.f32 %v969
      %972 = vmin.xlane.f32.xlu0 %v971
      %v973 = vpop.xlane.xlu0 %972
      %vm974 = vcmp.eq.f32.partialorder %v971, %v973
      %v975 = vsel %vm974, %v970, inf
      %976 = vmin.xlane.f32.xlu0 %v975
      %v977 = vpop.xlane.xlu0 %976
      %v978 = vcvt.f32.s32 %v977
      %v979 = vcvt.f32.s32 %v973
      %v980 = vshll.u32 %v979, 16
      %v981 = vadd.s32 %v980, %v978
      %v982 = vand.u32 %v849, 65535
      %v983 = vshra.s32 %v849, 16
      %v984 = vcvt.s32.f32 %v982
      %v985 = vcvt.s32.f32 %v983
      %986 = vmin.xlane.f32.xlu0 %v985
      %v987 = vpop.xlane.xlu0 %986
      %vm988 = vcmp.eq.f32.partialorder %v985, %v987
      %v989 = vsel %vm988, %v984, inf
      %990 = vmin.xlane.f32.xlu0 %v989
      %v991 = vpop.xlane.xlu0 %990
      %v992 = vcvt.f32.s32 %v991
      %v993 = vcvt.f32.s32 %v987
      %v994 = vshll.u32 %v993, 16
      %v995 = vadd.s32 %v994, %v992
      %v996 = vand.u32 %v850, 65535
      %v997 = vshra.s32 %v850, 16
      %v998 = vcvt.s32.f32 %v996
      %v999 = vcvt.s32.f32 %v997
      %1000 = vmin.xlane.f32.xlu0 %v999
      %v1001 = vpop.xlane.xlu0 %1000
      %vm1002 = vcmp.eq.f32.partialorder %v999, %v1001
      %v1003 = vsel %vm1002, %v998, inf
      %1004 = vmin.xlane.f32.xlu0 %v1003
      %v1005 = vpop.xlane.xlu0 %1004
      %v1006 = vcvt.f32.s32 %v1005
      %v1007 = vcvt.f32.s32 %v1001
      %v1008 = vshll.u32 %v1007, 16
      %v1009 = vadd.s32 %v1008, %v1006
      %v1010 = vand.u32 %v851, 65535
      %v1011 = vshra.s32 %v851, 16
      %v1012 = vcvt.s32.f32 %v1010
      %v1013 = vcvt.s32.f32 %v1011
      %1014 = vmin.xlane.f32.xlu0 %v1013
      %v1015 = vpop.xlane.xlu0 %1014
      %vm1016 = vcmp.eq.f32.partialorder %v1013, %v1015
      %v1017 = vsel %vm1016, %v1012, inf
      %1018 = vmin.xlane.f32.xlu0 %v1017
      %v1019 = vpop.xlane.xlu0 %1018
      %v1020 = vcvt.f32.s32 %v1019
      %v1021 = vcvt.f32.s32 %v1015
      %v1022 = vshll.u32 %v1021, 16
      %v1023 = vadd.s32 %v1022, %v1020
      %v1024 = vand.u32 %v852, 65535
      %v1025 = vshra.s32 %v852, 16
      %v1026 = vcvt.s32.f32 %v1024
      %v1027 = vcvt.s32.f32 %v1025
      %1028 = vmin.xlane.f32.xlu0 %v1027
      %v1029 = vpop.xlane.xlu0 %1028
      %vm1030 = vcmp.eq.f32.partialorder %v1027, %v1029
      %v1031 = vsel %vm1030, %v1026, inf
      %1032 = vmin.xlane.f32.xlu0 %v1031
      %v1033 = vpop.xlane.xlu0 %1032
      %v1034 = vcvt.f32.s32 %v1033
      %v1035 = vcvt.f32.s32 %v1029
      %v1036 = vshll.u32 %v1035, 16
      %v1037 = vadd.s32 %v1036, %v1034
      %v1038 = vand.u32 %v853, 65535
      %v1039 = vshra.s32 %v853, 16
      %v1040 = vcvt.s32.f32 %v1038
      %v1041 = vcvt.s32.f32 %v1039
      %1042 = vmin.xlane.f32.xlu0 %v1041
      %v1043 = vpop.xlane.xlu0 %1042
      %vm1044 = vcmp.eq.f32.partialorder %v1041, %v1043
      %v1045 = vsel %vm1044, %v1040, inf
      %1046 = vmin.xlane.f32.xlu0 %v1045
      %v1047 = vpop.xlane.xlu0 %1046
      %v1048 = vcvt.f32.s32 %v1047
      %v1049 = vcvt.f32.s32 %v1043
      %v1050 = vshll.u32 %v1049, 16
      %v1051 = vadd.s32 %v1050, %v1048
      %v1052 = vand.u32 %v854, 65535
      %v1053 = vshra.s32 %v854, 16
      %v1054 = vcvt.s32.f32 %v1052
      %v1055 = vcvt.s32.f32 %v1053
      %1056 = vmin.xlane.f32.xlu0 %v1055
      %v1057 = vpop.xlane.xlu0 %1056
      %vm1058 = vcmp.eq.f32.partialorder %v1055, %v1057
      %v1059 = vsel %vm1058, %v1054, inf
      %1060 = vmin.xlane.f32.xlu0 %v1059
      %v1061 = vpop.xlane.xlu0 %1060
      %v1062 = vcvt.f32.s32 %v1061
      %v1063 = vcvt.f32.s32 %v1057
      %v1064 = vshll.u32 %v1063, 16
      %v1065 = vadd.s32 %v1064, %v1062
      %v1066 = vand.u32 %v855, 65535
      %v1067 = vshra.s32 %v855, 16
      %v1068 = vcvt.s32.f32 %v1066
      %v1069 = vcvt.s32.f32 %v1067
      %1070 = vmin.xlane.f32.xlu0 %v1069
      %v1071 = vpop.xlane.xlu0 %1070
      %vm1072 = vcmp.eq.f32.partialorder %v1069, %v1071
      %v1073 = vsel %vm1072, %v1068, inf
      %1074 = vmin.xlane.f32.xlu0 %v1073
      %v1075 = vpop.xlane.xlu0 %1074
      %v1076 = vcvt.f32.s32 %v1075
      %v1077 = vcvt.f32.s32 %v1071
      %v1078 = vshll.u32 %v1077, 16
      %v1079 = vadd.s32 %v1078, %v1076
      %1080 = vst [vmem:[%s245] sm:$0xff] %v869
      %1081 = vst [vmem:[%s245 + $0x8] sm:$0xff] %v883
      %1082 = vst [vmem:[%s245 + $0x10] sm:$0xff] %v897
      %1083 = vst [vmem:[%s245 + $0x18] sm:$0xff] %v911
      %1084 = vst [vmem:[%s245 + $0x20] sm:$0xff] %v925
      %1085 = vst [vmem:[%s245 + $0x28] sm:$0xff] %v939
      %1086 = vst [vmem:[%s245 + $0x30] sm:$0xff] %v953
      %1087 = vst [vmem:[%s245 + $0x38] sm:$0xff] %v967
      %1088 = vst [vmem:[%s245 + $0x40] sm:$0xff] %v981
      %1089 = vst [vmem:[%s245 + $0x48] sm:$0xff] %v995
      %1090 = vst [vmem:[%s245 + $0x50] sm:$0xff] %v1009
      %1091 = vst [vmem:[%s245 + $0x58] sm:$0xff] %v1023
      %1092 = vst [vmem:[%s245 + $0x60] sm:$0xff] %v1037
      %1093 = vst [vmem:[%s245 + $0x68] sm:$0xff] %v1051
      %1094 = vst [vmem:[%s245 + $0x70] sm:$0xff] %v1065
      %1095 = vst [vmem:[%s245 + $0x78] sm:$0xff] %v1079
      %p1096 = scmp.eq.s32.totalorder %s18, 1
      // Predicated region
      $region33: #{_streaming_step.1} parent=31 // pred_check
        %p1097 = pneg %p1096
      $region34: #{_streaming_step.1} parent=31 // pred_check_branch
        %1099 = sbr.rel (%p1097) target = $region36
      $region35: #{_streaming_step.1} parent=31 // pred_region
        %v1100 = vsub.f32 %v787, %v821
        %v1101 = vmul.f32 %v1100, 1.442695
        %v1102 = vpow.pop %v1101
        %vm1103 = vcmask 1047559
        %v1104 = vsel %vm1103, %v1102, 0.0
        %1105 = vadd.xlane.f32.xlu0 %v1104
        %v1106 = vpop.xlane.xlu0 %1105
        %v1107 = vlog2.pop %v1106
        %v1108 = vmul.f32 %v1107, 0.6931472
        %v1109 = vadd.f32 %v821, %v1108
        %v1110 = vsub.f32 %v787, %v1109
        %v1111 = vsel %vm1103, %v1110, -inf
        %1112 = vmax.xlane.f32.xlu0 %v1111
        %v1113 = vpop.xlane.xlu0 %1112
        %vm1114 = vcmp.eq.f32.partialorder %v1110, %v1113
        %v1115 = vsel %vm1114, %v823, 128
        %v1116 = vsel %vm1103, %v1115, 2147483647
        %v1117 = vand.u32 %v1116, 65535
        %v1118 = vshra.s32 %v1116, 16
        %v1119 = vcvt.s32.f32 %v1117
        %v1120 = vcvt.s32.f32 %v1118
        %1121 = vmin.xlane.f32.xlu0 %v1120
        %v1122 = vpop.xlane.xlu0 %1121
        %vm1123 = vcmp.eq.f32.partialorder %v1120, %v1122
        %v1124 = vsel %vm1123, %v1119, inf
        %1125 = vmin.xlane.f32.xlu0 %v1124
        %v1126 = vpop.xlane.xlu0 %1125
        %v1127 = vcvt.f32.s32 %v1126
        %v1128 = vcvt.f32.s32 %v1122
        %v1129 = vshll.u32 %v1128, 16
        %v1130 = vadd.s32 %v1129, %v1127
        %vm1131 = vcmp.eq.s32.totalorder %v823, 0
        %v1132 = vsel %vm1131, %v1113, -inf
        %v1133 = vsel %vm1131, %v1130, 4294967295
        %vm1134 = vcmp.eq.s32.totalorder %v823, %v1130
        %v1135 = vsel %vm1134, -inf, %v1110
        %v1136 = vsel %vm1103, %v1135, -inf
        %1137 = vmax.xlane.f32.xlu0 %v1136
        %v1138 = vpop.xlane.xlu0 %1137
        %vm1139 = vcmp.eq.f32.partialorder %v1135, %v1138
        %v1140 = vsel %vm1139, %v823, 128
        %v1141 = vsel %vm1103, %v1140, 2147483647
        %v1142 = vand.u32 %v1141, 65535
        %v1143 = vshra.s32 %v1141, 16
        %v1144 = vcvt.s32.f32 %v1142
        %v1145 = vcvt.s32.f32 %v1143
        %1146 = vmin.xlane.f32.xlu0 %v1145
        %v1147 = vpop.xlane.xlu0 %1146
        %vm1148 = vcmp.eq.f32.partialorder %v1145, %v1147
        %v1149 = vsel %vm1148, %v1144, inf
        %1150 = vmin.xlane.f32.xlu0 %v1149
        %v1151 = vpop.xlane.xlu0 %1150
        %v1152 = vcvt.f32.s32 %v1151
        %v1153 = vcvt.f32.s32 %v1147
        %v1154 = vshll.u32 %v1153, 16
        %v1155 = vadd.s32 %v1154, %v1152
        %vm1156 = vcmp.eq.s32.totalorder %v823, 1
        %v1157 = vsel %vm1156, %v1138, %v1132
        %v1158 = vsel %vm1156, %v1155, %v1133
        %vm1159 = vcmp.eq.s32.totalorder %v823, %v1155
        %v1160 = vsel %vm1159, -inf, %v1135
        %v1161 = vsel %vm1103, %v1160, -inf
        %1162 = vmax.xlane.f32.xlu0 %v1161
        %v1163 = vpop.xlane.xlu0 %1162
        %vm1164 = vcmp.eq.f32.partialorder %v1160, %v1163
        %v1165 = vsel %vm1164, %v823, 128
        %v1166 = vsel %vm1103, %v1165, 2147483647
        %v1167 = vand.u32 %v1166, 65535
        %v1168 = vshra.s32 %v1166, 16
        %v1169 = vcvt.s32.f32 %v1167
        %v1170 = vcvt.s32.f32 %v1168
        %1171 = vmin.xlane.f32.xlu0 %v1170
        %v1172 = vpop.xlane.xlu0 %1171
        %vm1173 = vcmp.eq.f32.partialorder %v1170, %v1172
        %v1174 = vsel %vm1173, %v1169, inf
        %1175 = vmin.xlane.f32.xlu0 %v1174
        %v1176 = vpop.xlane.xlu0 %1175
        %v1177 = vcvt.f32.s32 %v1176
        %v1178 = vcvt.f32.s32 %v1172
        %v1179 = vshll.u32 %v1178, 16
        %v1180 = vadd.s32 %v1179, %v1177
        %vm1181 = vcmp.eq.s32.totalorder %v823, 2
        %v1182 = vsel %vm1181, %v1163, %v1157
        %v1183 = vsel %vm1181, %v1180, %v1158
        %vm1184 = vcmp.eq.s32.totalorder %v823, %v1180
        %v1185 = vsel %vm1184, -inf, %v1160
        %v1186 = vsel %vm1103, %v1185, -inf
        %1187 = vmax.xlane.f32.xlu0 %v1186
        %v1188 = vpop.xlane.xlu0 %1187
        %vm1189 = vcmp.eq.f32.partialorder %v1185, %v1188
        %v1190 = vsel %vm1189, %v823, 128
        %v1191 = vsel %vm1103, %v1190, 2147483647
        %v1192 = vand.u32 %v1191, 65535
        %v1193 = vshra.s32 %v1191, 16
        %v1194 = vcvt.s32.f32 %v1192
        %v1195 = vcvt.s32.f32 %v1193
        %1196 = vmin.xlane.f32.xlu0 %v1195
        %v1197 = vpop.xlane.xlu0 %1196
        %vm1198 = vcmp.eq.f32.partialorder %v1195, %v1197
        %v1199 = vsel %vm1198, %v1194, inf
        %1200 = vmin.xlane.f32.xlu0 %v1199
        %v1201 = vpop.xlane.xlu0 %1200
        %v1202 = vcvt.f32.s32 %v1201
        %v1203 = vcvt.f32.s32 %v1197
        %v1204 = vshll.u32 %v1203, 16
        %v1205 = vadd.s32 %v1204, %v1202
        %vm1206 = vcmp.eq.s32.totalorder %v823, 3
        %v1207 = vsel %vm1206, %v1188, %v1182
        %v1208 = vsel %vm1206, %v1205, %v1183
        %vm1209 = vcmp.eq.s32.totalorder %v823, %v1205
        %v1210 = vsel %vm1209, -inf, %v1185
        %v1211 = vsel %vm1103, %v1210, -inf
        %1212 = vmax.xlane.f32.xlu0 %v1211
        %v1213 = vpop.xlane.xlu0 %1212
        %vm1214 = vcmp.eq.f32.partialorder %v1210, %v1213
        %v1215 = vsel %vm1214, %v823, 128
        %v1216 = vsel %vm1103, %v1215, 2147483647
        %v1217 = vand.u32 %v1216, 65535
        %v1218 = vshra.s32 %v1216, 16
        %v1219 = vcvt.s32.f32 %v1217
        %v1220 = vcvt.s32.f32 %v1218
        %1221 = vmin.xlane.f32.xlu0 %v1220
        %v1222 = vpop.xlane.xlu0 %1221
        %vm1223 = vcmp.eq.f32.partialorder %v1220, %v1222
        %v1224 = vsel %vm1223, %v1219, inf
        %1225 = vmin.xlane.f32.xlu0 %v1224
        %v1226 = vpop.xlane.xlu0 %1225
        %v1227 = vcvt.f32.s32 %v1226
        %v1228 = vcvt.f32.s32 %v1222
        %v1229 = vshll.u32 %v1228, 16
        %v1230 = vadd.s32 %v1229, %v1227
        %vm1231 = vcmp.eq.s32.totalorder %v823, 4
        %v1232 = vsel %vm1231, %v1213, %v1207
        %v1233 = vsel %vm1231, %v1230, %v1208
        %vm1234 = vcmp.eq.s32.totalorder %v823, %v1230
        %v1235 = vsel %vm1234, -inf, %v1210
        %v1236 = vsel %vm1103, %v1235, -inf
        %1237 = vmax.xlane.f32.xlu0 %v1236
        %v1238 = vpop.xlane.xlu0 %1237
        %vm1239 = vcmp.eq.f32.partialorder %v1235, %v1238
        %v1240 = vsel %vm1239, %v823, 128
        %v1241 = vsel %vm1103, %v1240, 2147483647
        %v1242 = vand.u32 %v1241, 65535
        %v1243 = vshra.s32 %v1241, 16
        %v1244 = vcvt.s32.f32 %v1242
        %v1245 = vcvt.s32.f32 %v1243
        %1246 = vmin.xlane.f32.xlu0 %v1245
        %v1247 = vpop.xlane.xlu0 %1246
        %vm1248 = vcmp.eq.f32.partialorder %v1245, %v1247
        %v1249 = vsel %vm1248, %v1244, inf
        %1250 = vmin.xlane.f32.xlu0 %v1249
        %v1251 = vpop.xlane.xlu0 %1250
        %v1252 = vcvt.f32.s32 %v1251
        %v1253 = vcvt.f32.s32 %v1247
        %v1254 = vshll.u32 %v1253, 16
        %v1255 = vadd.s32 %v1254, %v1252
        %vm1256 = vcmp.eq.s32.totalorder %v823, 5
        %v1257 = vsel %vm1256, %v1238, %v1232
        %v1258 = vsel %vm1256, %v1255, %v1233
        %vm1259 = vcmp.eq.s32.totalorder %v823, %v1255
        %v1260 = vsel %vm1259, -inf, %v1235
        %v1261 = vsel %vm1103, %v1260, -inf
        %1262 = vmax.xlane.f32.xlu0 %v1261
        %v1263 = vpop.xlane.xlu0 %1262
        %vm1264 = vcmp.eq.f32.partialorder %v1260, %v1263
        %v1265 = vsel %vm1264, %v823, 128
        %v1266 = vsel %vm1103, %v1265, 2147483647
        %v1267 = vand.u32 %v1266, 65535
        %v1268 = vshra.s32 %v1266, 16
        %v1269 = vcvt.s32.f32 %v1267
        %v1270 = vcvt.s32.f32 %v1268
        %1271 = vmin.xlane.f32.xlu0 %v1270
        %v1272 = vpop.xlane.xlu0 %1271
        %vm1273 = vcmp.eq.f32.partialorder %v1270, %v1272
        %v1274 = vsel %vm1273, %v1269, inf
        %1275 = vmin.xlane.f32.xlu0 %v1274
        %v1276 = vpop.xlane.xlu0 %1275
        %v1277 = vcvt.f32.s32 %v1276
        %v1278 = vcvt.f32.s32 %v1272
        %v1279 = vshll.u32 %v1278, 16
        %v1280 = vadd.s32 %v1279, %v1277
        %vm1281 = vcmp.eq.s32.totalorder %v823, 6
        %v1282 = vsel %vm1281, %v1263, %v1257
        %v1283 = vsel %vm1281, %v1280, %v1258
        %vm1284 = vcmp.eq.s32.totalorder %v823, %v1280
        %v1285 = vsel %vm1284, -inf, %v1260
        %v1286 = vsel %vm1103, %v1285, -inf
        %1287 = vmax.xlane.f32.xlu0 %v1286
        %v1288 = vpop.xlane.xlu0 %1287
        %vm1289 = vcmp.eq.f32.partialorder %v1285, %v1288
        %v1290 = vsel %vm1289, %v823, 128
        %v1291 = vsel %vm1103, %v1290, 2147483647
        %v1292 = vand.u32 %v1291, 65535
        %v1293 = vshra.s32 %v1291, 16
        %v1294 = vcvt.s32.f32 %v1292
        %v1295 = vcvt.s32.f32 %v1293
        %1296 = vmin.xlane.f32.xlu0 %v1295
        %v1297 = vpop.xlane.xlu0 %1296
        %vm1298 = vcmp.eq.f32.partialorder %v1295, %v1297
        %v1299 = vsel %vm1298, %v1294, inf
        %1300 = vmin.xlane.f32.xlu0 %v1299
        %v1301 = vpop.xlane.xlu0 %1300
        %v1302 = vcvt.f32.s32 %v1301
        %v1303 = vcvt.f32.s32 %v1297
        %v1304 = vshll.u32 %v1303, 16
        %v1305 = vadd.s32 %v1304, %v1302
        %vm1306 = vcmp.eq.s32.totalorder %v823, 7
        %v1307 = vsel %vm1306, %v1288, %v1282
        %v1308 = vsel %vm1306, %v1305, %v1283
        %vm1309 = vcmp.eq.s32.totalorder %v823, %v1305
        %v1310 = vsel %vm1309, -inf, %v1285
        %v1311 = vsel %vm1103, %v1310, -inf
        %1312 = vmax.xlane.f32.xlu0 %v1311
        %v1313 = vpop.xlane.xlu0 %1312
        %vm1314 = vcmp.eq.f32.partialorder %v1310, %v1313
        %v1315 = vsel %vm1314, %v823, 128
        %v1316 = vsel %vm1103, %v1315, 2147483647
        %v1317 = vand.u32 %v1316, 65535
        %v1318 = vshra.s32 %v1316, 16
        %v1319 = vcvt.s32.f32 %v1317
        %v1320 = vcvt.s32.f32 %v1318
        %1321 = vmin.xlane.f32.xlu0 %v1320
        %v1322 = vpop.xlane.xlu0 %1321
        %vm1323 = vcmp.eq.f32.partialorder %v1320, %v1322
        %v1324 = vsel %vm1323, %v1319, inf
        %1325 = vmin.xlane.f32.xlu0 %v1324
        %v1326 = vpop.xlane.xlu0 %1325
        %v1327 = vcvt.f32.s32 %v1326
        %v1328 = vcvt.f32.s32 %v1322
        %v1329 = vshll.u32 %v1328, 16
        %v1330 = vadd.s32 %v1329, %v1327
        %vm1331 = vcmp.eq.s32.totalorder %v823, 8
        %v1332 = vsel %vm1331, %v1313, %v1307
        %v1333 = vsel %vm1331, %v1330, %v1308
        %vm1334 = vcmp.eq.s32.totalorder %v823, %v1330
        %v1335 = vsel %vm1334, -inf, %v1310
        %v1336 = vsel %vm1103, %v1335, -inf
        %1337 = vmax.xlane.f32.xlu0 %v1336
        %v1338 = vpop.xlane.xlu0 %1337
        %vm1339 = vcmp.eq.f32.partialorder %v1335, %v1338
        %v1340 = vsel %vm1339, %v823, 128
        %v1341 = vsel %vm1103, %v1340, 2147483647
        %v1342 = vand.u32 %v1341, 65535
        %v1343 = vshra.s32 %v1341, 16
        %v1344 = vcvt.s32.f32 %v1342
        %v1345 = vcvt.s32.f32 %v1343
        %1346 = vmin.xlane.f32.xlu0 %v1345
        %v1347 = vpop.xlane.xlu0 %1346
        %vm1348 = vcmp.eq.f32.partialorder %v1345, %v1347
        %v1349 = vsel %vm1348, %v1344, inf
        %1350 = vmin.xlane.f32.xlu0 %v1349
        %v1351 = vpop.xlane.xlu0 %1350
        %v1352 = vcvt.f32.s32 %v1351
        %v1353 = vcvt.f32.s32 %v1347
        %v1354 = vshll.u32 %v1353, 16
        %v1355 = vadd.s32 %v1354, %v1352
        %vm1356 = vcmp.eq.s32.totalorder %v823, 9
        %v1357 = vsel %vm1356, %v1338, %v1332
        %v1358 = vsel %vm1356, %v1355, %v1333
        %1359 = vst [vmem:[%s4 - $0x7] sm:$0x80] %v1357
        %1360 = vst [vmem:[%s5 - $0x7] sm:$0x80] %v1358
        %1361 = vst [vmem:[%s6 - $0x7] sm:$0x80] %v636
      $region36: #{_streaming_step.1} parent=31 // pred_fallthru
        _
      %s1362 = smul.u32 16, %s18
      %p1363 = scmp.lt.s32.totalorder %s1362, 31
      %s1364 = scalar_select %p1363, %s1362, 31
      %s1365 = smul.addr %s1364, 8
      %s1366 = scalar_lea.vmem %s3, %s1365
      // Predicated region
      $region37: #{_streaming_step.1} parent=31 // pred_check
        %p1367 = pneg %p104
      $region38: #{_streaming_step.1} parent=31 // pred_check_branch
        %1369 = sbr.rel (%p1367) target = $region40
      $region39: #{_streaming_step.1} parent=31 // pred_region
        %s1370 = smul.u32 16, %s18
      $region40: #{_streaming_step.1} parent=31 // pred_fallthru
        _
      // Predicated region
      $region41: #{_streaming_step.1} parent=31 // pred_check
        %p1371 = pneg %p125
      $region42: #{_streaming_step.1} parent=31 // pred_check_branch
        %1373 = sbr.rel (%p1371) target = $region44
      $region43: #{_streaming_step.1} parent=31 // pred_region
        _
      $region44: #{_streaming_step.1} parent=31 // pred_fallthru
        _
      // Predicated region
      $region45: #{_streaming_step.1} parent=31 // pred_check
        %p1374 = pneg %p146
      $region46: #{_streaming_step.1} parent=31 // pred_check_branch
        %1376 = sbr.rel (%p1374) target = $region48
      $region47: #{_streaming_step.1} parent=31 // pred_region
        _
      $region48: #{_streaming_step.1} parent=31 // pred_fallthru
        _
      // Predicated region
      $region49: #{_streaming_step.1} parent=31 // pred_check
        %p1377 = pneg %p167
      $region50: #{_streaming_step.1} parent=31 // pred_check_branch
        %1379 = sbr.rel (%p1377) target = $region52
      $region51: #{_streaming_step.1} parent=31 // pred_region
        _
      $region52: #{_streaming_step.1} parent=31 // pred_fallthru
        _
      // Predicated region
      $region53: #{_streaming_step.1} parent=31 // pred_check
        %p1380 = pneg %p125
      $region54: #{_streaming_step.1} parent=31 // pred_check_branch
        %1382 = sbr.rel (%p1380) target = $region56
      $region55: #{_streaming_step.1} parent=31 // pred_region
        _
      $region56: #{_streaming_step.1} parent=31 // pred_fallthru
        _
      // Predicated region
      $region57: #{_streaming_step.1} parent=31 // pred_check
        %p1383 = pneg %p146
      $region58: #{_streaming_step.1} parent=31 // pred_check_branch
        %1385 = sbr.rel (%p1383) target = $region60
      $region59: #{_streaming_step.1} parent=31 // pred_region
        _
      $region60: #{_streaming_step.1} parent=31 // pred_fallthru
        _
      // Predicated region
      $region61: #{_streaming_step.1} parent=31 // pred_check
        %p1386 = pneg %p167
      $region62: #{_streaming_step.1} parent=31 // pred_check_branch
        %1388 = sbr.rel (%p1386) target = $region64
      $region63: #{_streaming_step.1} parent=31 // pred_region
        _
      $region64: #{_streaming_step.1} parent=31 // pred_fallthru
        _
    $region32: #{_streaming_step.1} parent=5 // pred_fallthru
      _
    %p1389 = scmp.le.s32.totalorder 2, %s13
    // Predicated region
    $region65: #{_streaming_step.1} parent=5 // pred_check
      %p1390 = pneg %p1389
    $region66: #{_streaming_step.1} parent=5 // pred_check_branch
      %1392 = sbr.rel (%p1390) target = $region68
    $region67: #{_streaming_step.1} parent=5 // pred_region
      %s1393 = ssub.s32 %s13, 2
      // Predicated region
      $region69: #{_streaming_step.1} parent=67 // pred_check
        %p1394 = pneg %p110
      $region70: #{_streaming_step.1} parent=67 // pred_check_branch
        %1396 = sbr.rel (%p1394) target = $region72
      $region71: #{_streaming_step.1} parent=67 // pred_region
        %s1397 = smul.u32 16, %s19
        %p1398 = scmp.lt.s32.totalorder %s1397, 31
        %s1399 = scalar_select %p1398, %s1397, 31
        %s1400 = smul.addr %s1399, 8
        %s1401 = scalar_lea.vmem %s3, %s1400
      $region72: #{_streaming_step.1} parent=67 // pred_fallthru
        _
    $region68: #{_streaming_step.1} parent=5 // pred_fallthru
      _
  $region6: #{_streaming_step.1} parent=0 // loop_footer
    %s17 = sadd.s32 1, %s13
  $region7: #{_streaming_step.1} parent=0 // loop_footer_branch
    %12 = sbr.rel target = $region3
  $region8: #{_streaming_step.1} parent=0 // loop_exit
    _

</llo_original>
